<compile_context>
chip_gen: v7x
topology: tpu7x:2x2x1
jax: 0.10.0
libtpu: 0.0.40
codegen_flags: <defaults>
</compile_context>

<pallas_src>
import functools

import jax
import jax.numpy as jnp
from jax import lax
from jax.experimental import pallas as pl
from jax.experimental.pallas import tpu as pltpu


# ----------------------------------------------------------------------------
# Kernels
# ----------------------------------------------------------------------------
def _ret_msr_kernel(q_ref, k_ref, v_ref, d_ref, out_ref, msr_ref, *,
                    inv_scale, matmul_dtype):
    ki = pl.program_id(2)

    @pl.when(ki == 0)
    def _():
        out_ref[...] = jnp.zeros_like(out_ref)

    q = q_ref[:, 0]                       # (B, TQ, Dk)
    if inv_scale != 1.0:                  # trace-time branch (Python float)
        q = q * inv_scale
    k = k_ref[:, 0]                       # (B, TK, Dk)
    v = v_ref[:, 0]                       # (B, TK, Dk)
    d = d_ref[0]                          # (TQ, TK)

    if matmul_dtype is not None:          # e.g. bf16 MXU inputs on v7x
        q = q.astype(matmul_dtype)
        k = k.astype(matmul_dtype)

    # Batched Q @ K^T, contracting on the last dim of both (no K transpose).
    scores = jnp.einsum("bqd,bkd->bqk", q, k,
                        preferred_element_type=jnp.float32)   # (B, TQ, TK)

    msr = scores * d[None, :, :]
    msr_ref[:, 0] = msr.astype(msr_ref.dtype)

    # Accumulate directly into the resident f32 output block.
    out_ref[:, 0] += jnp.einsum("bqk,bkd->bqd", msr, v,
                                preferred_element_type=jnp.float32)


def _ret_msr_masked_kernel(q_ref, k_ref, v_ref, d_ref, m_ref, out_ref, msr_ref,
                           *, inv_scale, matmul_dtype):
    ki = pl.program_id(2)

    @pl.when(ki == 0)
    def _():
        out_ref[...] = jnp.zeros_like(out_ref)

    q = q_ref[:, 0]
    if inv_scale != 1.0:
        q = q * inv_scale
    k = k_ref[:, 0]
    v = v_ref[:, 0]
    d = d_ref[0]
    mask = m_ref[:, 0]                    # (B, TQ, TK), original dtype

    if matmul_dtype is not None:
        q = q.astype(matmul_dtype)
        k = k.astype(matmul_dtype)

    scores = jnp.einsum("bqd,bkd->bqk", q, k,
                        preferred_element_type=jnp.float32)
    scores = jnp.where(mask != 0, scores, jnp.float32(-1e9))

    msr = scores * d[None, :, :]
    msr_ref[:, 0] = msr.astype(msr_ref.dtype)

    # MSR kept in f32 here: masked tiles carry -1e9 * D values.
    out_ref[:, 0] += jnp.einsum("bqk,bkd->bqd", msr, v,
                                preferred_element_type=jnp.float32)


# ----------------------------------------------------------------------------
# Tiling / VMEM helpers
# ----------------------------------------------------------------------------
def _vmem_capacity_bytes():
    try:
        return int(pltpu.get_tpu_info().vmem_capacity_bytes)
    except Exception:
        return 64 * 1024 * 1024   # conservative default (v7x)


def _round_up(x, m):
    return ((x + m - 1) // m) * m


def _largest_aligned_divisor(dim, limit, align):
    """Largest multiple of `align` that divides `dim` and is <= limit, or the
    full extent `dim` if no such divisor exists (full-dim blocks are legal)."""
    t = min((limit // align) * align, (dim // align) * align)
    while t >= align:
        if dim % t == 0:
            return t
        t -= align
    return dim


def _per_step_bytes(B, tq, tk, Dk, mask_itemsize):
    f32 = 4
    b = B * tq * Dk * f32          # Q tile
    b += 2 * B * tk * Dk * f32     # K, V tiles
    b += tq * tk * f32             # D tile
    b += B * tq * Dk * f32         # out tile (resident accumulator)
    b += B * tq * tk * f32         # MSR tile
    b += B * tq * tk * mask_itemsize
    return b


def _pad_axes(x, axes, pad_amount):
    if pad_amount == 0:
        return x
    pads = [(0, 0)] * x.ndim
    for ax in axes:
        pads[ax] = (0, pad_amount)
    return jnp.pad(x, pads)


# ----------------------------------------------------------------------------
# Wrapper
# ----------------------------------------------------------------------------
def ret_dot_product_msr(Q, K, V, D, scale=None, mask=None, *,
                        tq=None, tk=None, matmul_dtype=None):
    """Pallas implementation of RetDotProductMSR.forward (dropout_rate=0).

    scale must be a Python number or None (matches the torch `if scale:`).
    matmul_dtype=jnp.bfloat16 casts Q/K for the first matmul (f32 accumulate);
    leave None for bit-faithful f32 behaviour.
    """
    B, H, S, Dk = Q.shape
    assert K.shape == (B, H, S, Dk) and V.shape == (B, H, S, Dk)
    assert D.shape == (H, S, S)

    inv_scale = (1.0 / float(scale)) if scale else 1.0

    # torch: mask.view_as(scores); keep original dtype, compare !=0 in-kernel.
    if mask is not None:
        mask = jnp.reshape(mask, (B, H, S, S))
    mask_itemsize = 0 if mask is None else jnp.dtype(mask.dtype).itemsize

    TQ_PREF, TK_PREF = 512, 1024

    # Pad S to a multiple of 128 only when tiling is actually required and no
    # aligned tiling would otherwise exist (keeps per-step VMEM O(tq*tk)).
    if S > TQ_PREF and S % 128 != 0:
        Sp = _round_up(S, 128)
    else:
        Sp = S
    pad = Sp - S
    if pad:
        Q = _pad_axes(Q, (2,), pad)
        K = _pad_axes(K, (2,), pad)
        V = _pad_axes(V, (2,), pad)
        D = _pad_axes(D, (1, 2), pad)          # zero D => padded cols add 0
        if mask is not None:
            mask = _pad_axes(mask, (2, 3), pad)

    vmem_cap = _vmem_capacity_bytes()
    budget = (vmem_cap * 3) // 4               # ~48 MiB v7x, ~96 MiB v5e/v6e

    # Tile selection: biggest aligned tiles whose double-buffered footprint
    # fits the budget.  TQ is a sublane dim (align 8); TK is the lane dim of
    # the D / MSR tiles (align 128) so the MSR writeback stays lane-dense.
    if tq is not None and tk is not None:
        tq_sel, tk_sel = tq, tk
    else:
        tq_lim, tk_lim = TQ_PREF, TK_PREF
        while True:
            tq_sel = tq if tq is not None else _largest_aligned_divisor(Sp, tq_lim, 8)
            tk_sel = tk if tk is not None else _largest_aligned_divisor(Sp, tk_lim, 128)
            fits = 2 * _per_step_bytes(B, tq_sel, tk_sel, Dk, mask_itemsize) <= budget
            if fits or (tq_lim <= 8 and tk_lim <= 128):
                break
            if tk_lim > 128:
                tk_lim = max(tk_lim // 2, 128)
            else:
                tq_lim = max(tq_lim // 2, 8)
    assert Sp % tq_sel == 0 and Sp % tk_sel == 0, (Sp, tq_sel, tk_sel)

    grid = (H, Sp // tq_sel, Sp // tk_sel)     # reduction axis (ki) last

    q_spec = pl.BlockSpec((B, 1, tq_sel, Dk), lambda h, qi, ki: (0, h, qi, 0))
    k_spec = pl.BlockSpec((B, 1, tk_sel, Dk), lambda h, qi, ki: (0, h, ki, 0))
    v_spec = pl.BlockSpec((B, 1, tk_sel, Dk), lambda h, qi, ki: (0, h, ki, 0))
    d_spec = pl.BlockSpec((1, tq_sel, tk_sel), lambda h, qi, ki: (h, qi, ki))
    out_spec = pl.BlockSpec((B, 1, tq_sel, Dk), lambda h, qi, ki: (0, h, qi, 0))
    msr_spec = pl.BlockSpec((B, 1, tq_sel, tk_sel),
                            lambda h, qi, ki: (0, h, qi, ki))

    out_shapes = (jax.ShapeDtypeStruct((B, H, Sp, Dk), jnp.float32),
                  jax.ShapeDtypeStruct((B, H, Sp, Sp), jnp.float32))

    if mask is None:
        kernel = functools.partial(_ret_msr_kernel, inv_scale=inv_scale,
                                   matmul_dtype=matmul_dtype)
        in_specs = [q_spec, k_spec, v_spec, d_spec]
        args = (Q, K, V, D)
    else:
        m_spec = pl.BlockSpec((B, 1, tq_sel, tk_sel),
                              lambda h, qi, ki: (0, h, qi, ki))
        kernel = functools.partial(_ret_msr_masked_kernel, inv_scale=inv_scale,
                                   matmul_dtype=matmul_dtype)
        in_specs = [q_spec, k_spec, v_spec, d_spec, m_spec]
        args = (Q, K, V, D, mask)

    per_step = _per_step_bytes(B, tq_sel, tk_sel, Dk, mask_itemsize)
    vmem_limit = int(min(max((2 * per_step * 5) // 4, 32 * 1024 * 1024),
                         budget))

    output, msr = pl.pallas_call(
        kernel,
        out_shape=out_shapes,
        grid_spec=pltpu.PrefetchScalarGridSpec(
            num_scalar_prefetch=0,
            grid=grid,
            in_specs=in_specs,
            out_specs=[out_spec, msr_spec],
        ),
        compiler_params=pltpu.CompilerParams(
            dimension_semantics=("parallel", "parallel", "arbitrary"),
            vmem_limit_bytes=vmem_limit),
    )(*args)

    if pad:
        output = output[:, :, :S, :]
        msr = msr[:, :, :S, :S]
    return output, msr


# ----------------------------------------------------------------------------
# Pure-JAX reference (mirrors the PyTorch module)
# ----------------------------------------------------------------------------
def _reference(Q, K, V, D, scale=None, mask=None):
    scores = jnp.einsum("bhqd,bhkd->bhqk", Q, K,
                        precision=lax.Precision.HIGHEST)
    if scale:
        scores = scores / scale
    if mask is not None:
        mask = jnp.reshape(mask, scores.shape)
        scores = jnp.where(mask != 0, scores, jnp.float32(-1e9))
    msr = scores * D[None, ...]
    out = jnp.einsum("bhqk,bhkd->bhqd", msr, V,
                     precision=lax.Precision.HIGHEST)
    return out, msr


def _decay_matrix(H, S):
    gammas = 1.0 - jnp.exp2(-5.0 - jnp.arange(H, dtype=jnp.float32))
    n = jnp.arange(S, dtype=jnp.float32)[:, None]
    m = jnp.arange(S, dtype=jnp.float32)[None, :]
    D = jnp.where(n >= m, gammas[:, None, None] ** (n - m)[None, :, :], 0.0)
    return D.astype(jnp.float32), (n >= m)


if __name__ == "__main__":
    # --- Test 1/2: small, tiling-exercising shapes (2x2 tiles per head). ---
    B, H, S, Dk = 2, 4, 256, 32
    TQ, TK = 128, 128

    key = jax.random.PRNGKey(0)
    kq, kk, kv, kq2, kk2, kv2 = jax.random.split(key, 6)

    Q = jax.random.normal(kq, (B, H, S, Dk), dtype=jnp.float32)
    K = jax.random.normal(kk, (B, H, S, Dk), dtype=jnp.float32)
    V = jax.random.normal(kv, (B, H, S, Dk), dtype=jnp.float32)
    D, causal = _decay_matrix(H, S)
    scale = float(Dk) ** 0.5

    # 1) Tiled, unmasked.
    out, msr = ret_dot_product_msr(Q, K, V, D, scale=scale, tq=TQ, tk=TK)
    jax.block_until_ready((out, msr))
    out_ref, msr_ref = _reference(Q, K, V, D, scale=scale)
    assert jnp.allclose(out, out_ref, atol=5e-3, rtol=5e-3)
    assert jnp.allclose(msr, msr_ref, atol=5e-3, rtol=5e-3)

    # 2) Tiled, masked (causal float mask, as PyTorch callers typically pass).
    mask = jnp.broadcast_to(causal.astype(jnp.float32), (B, H, S, S))
    out_m, msr_m = ret_dot_product_msr(Q, K, V, D, scale=scale, mask=mask,
                                       tq=TQ, tk=TK)
    jax.block_until_ready((out_m, msr_m))
    out_mr, msr_mr = _reference(Q, K, V, D, scale=scale, mask=mask)
    assert jnp.allclose(out_m, out_mr, atol=5e-3, rtol=5e-3)
    assert jnp.allclose(msr_m, msr_mr, atol=5e-3, rtol=5e-3)

    # --- Test 3: default tile selection + non-128-multiple S (padding path),
    #     scale=None exercises the skipped inv_scale multiply. ---
    B3, H3, S3 = 1, 2, 520
    Q3 = jax.random.normal(kq2, (B3, H3, S3, Dk), dtype=jnp.float32)
    K3 = jax.random.normal(kk2, (B3, H3, S3, Dk), dtype=jnp.float32)
    V3 = jax.random.normal(kv2, (B3, H3, S3, Dk), dtype=jnp.float32)
    D3, _ = _decay_matrix(H3, S3)

    out3, msr3 = ret_dot_product_msr(Q3, K3, V3, D3, scale=None)
    jax.block_until_ready((out3, msr3))
    out3_ref, msr3_ref = _reference(Q3, K3, V3, D3, scale=None)
    assert out3.shape == (B3, H3, S3, Dk) and msr3.shape == (B3, H3, S3, S3)
    assert jnp.allclose(out3, out3_ref, atol=5e-3, rtol=5e-3)
    assert jnp.allclose(msr3, msr3_ref, atol=5e-3, rtol=5e-3)

    # TODO(synk): nn.Dropout path (dropout_rate > 0) not implemented; would use
    # pltpu.prng_seed / pltpu.prng_random_bits on the MSR tile.
    # TODO(synk): optional skip of fully-masked (qi < ki) tiles for causal D
    # via scalar-prefetched per-tile flags is not implemented.

    print("KERNEL_OK")
</pallas_src>

<mosaic_0001>
module attributes {stable_mosaic.version = 11 : i64} {
  func.func @_ret_msr_kernel(%arg0: i32, %arg1: i32, %arg2: i32, %arg3: memref<2x1x128x32xf32, #tpu.memory_space<vmem>>, %arg4: memref<2x1x128x32xf32, #tpu.memory_space<vmem>>, %arg5: memref<2x1x128x32xf32, #tpu.memory_space<vmem>>, %arg6: memref<1x128x128xf32, #tpu.memory_space<vmem>>, %arg7: memref<2x1x128x32xf32, #tpu.memory_space<vmem>>, %arg8: memref<2x1x128x128xf32, #tpu.memory_space<vmem>>) attributes {dimension_semantics = [#tpu.dimension_semantics<parallel>, #tpu.dimension_semantics<parallel>, #tpu.dimension_semantics<arbitrary>], iteration_bounds = array<i64: 4, 2, 2>, scalar_prefetch = 0 : i64, scratch_operands = 0 : i64, tpu.core_type = #tpu.core_type<tc>, window_params = [{transform_indices = @transform_0, window_bounds = array<i64: 2, 1, 128, 32>}, {transform_indices = @transform_1, window_bounds = array<i64: 2, 1, 128, 32>}, {transform_indices = @transform_2, window_bounds = array<i64: 2, 1, 128, 32>}, {transform_indices = @transform_3, window_bounds = array<i64: 1, 128, 128>}, {transform_indices = @transform_4, window_bounds = array<i64: 2, 1, 128, 32>}, {transform_indices = @transform_5, window_bounds = array<i64: 2, 1, 128, 128>}]} {
    %c0_i32 = arith.constant 0 : i32
    %0 = arith.cmpi eq, %arg2, %c0_i32 : i32
    %1 = arith.extui %0 : i1 to i32
    %c0_i32_0 = arith.constant 0 : i32
    %2 = arith.cmpi ne, %1, %c0_i32_0 : i32
    scf.if %2 {
      %cst_29 = arith.constant 0.000000e+00 : f32
      %27 = vector.broadcast %cst_29 : f32 to vector<2x1x128x32xf32>
      %c0_30 = arith.constant 0 : index
      %c0_31 = arith.constant 0 : index
      %c0_32 = arith.constant 0 : index
      %c0_33 = arith.constant 0 : index
      %28 = vector.load %arg7[%c0_30, %c0_31, %c0_32, %c0_33] : memref<2x1x128x32xf32, #tpu.memory_space<vmem>>, vector<2x1x128x32xf32>
      tpu.vector_store %arg7[%c0_30, %c0_31, %c0_32, %c0_33], %27 {strides = array<i32>} : memref<2x1x128x32xf32, #tpu.memory_space<vmem>>, vector<2x1x128x32xf32>,
    } else {
    }
    %c0 = arith.constant 0 : index
    %c0_1 = arith.constant 0 : index
    %c0_2 = arith.constant 0 : index
    %c0_3 = arith.constant 0 : index
    %3 = vector.load %arg3[%c0, %c0_1, %c0_2, %c0_3] : memref<2x1x128x32xf32, #tpu.memory_space<vmem>>, vector<2x1x128x32xf32>
    %4 = vector.shape_cast %3 : vector<2x1x128x32xf32> to vector<2x128x32xf32>
    %cst = arith.constant 0.176776692 : f32
    %5 = vector.broadcast %cst : f32 to vector<2x128x32xf32>
    %6 = arith.mulf %4, %5 : vector<2x128x32xf32>
    %c0_4 = arith.constant 0 : index
    %c0_5 = arith.constant 0 : index
    %c0_6 = arith.constant 0 : index
    %c0_7 = arith.constant 0 : index
    %7 = vector.load %arg4[%c0_4, %c0_5, %c0_6, %c0_7] : memref<2x1x128x32xf32, #tpu.memory_space<vmem>>, vector<2x1x128x32xf32>
    %8 = vector.shape_cast %7 : vector<2x1x128x32xf32> to vector<2x128x32xf32>
    %c0_8 = arith.constant 0 : index
    %c0_9 = arith.constant 0 : index
    %c0_10 = arith.constant 0 : index
    %c0_11 = arith.constant 0 : index
    %9 = vector.load %arg5[%c0_8, %c0_9, %c0_10, %c0_11] : memref<2x1x128x32xf32, #tpu.memory_space<vmem>>, vector<2x1x128x32xf32>
    %10 = vector.shape_cast %9 : vector<2x1x128x32xf32> to vector<2x128x32xf32>
    %c0_12 = arith.constant 0 : index
    %c0_13 = arith.constant 0 : index
    %c0_14 = arith.constant 0 : index
    %11 = vector.load %arg6[%c0_12, %c0_13, %c0_14] : memref<1x128x128xf32, #tpu.memory_space<vmem>>, vector<1x128x128xf32>
    %12 = vector.shape_cast %11 : vector<1x128x128xf32> to vector<128x128xf32>
    "tpu.trace_start"() <{level = 10 : i32, message = "bqd,bkd->bqk"}> : () -> ()
    %cst_15 = arith.constant dense<0.000000e+00> : vector<2x128x128xf32>
    %13 = tpu.matmul %6, %8, %cst_15 {dimension_numbers = #tpu.dot_dimension_numbers<[2], [2], [1], [1], [0, 0, 0, 1, 1, 1], [0], [0]>} : vector<2x128x32xf32>, vector<2x128x32xf32>, vector<2x128x128xf32> -> vector<2x128x128xf32>
    "tpu.trace_stop"() : () -> ()
    %14 = vector.shape_cast %12 : vector<128x128xf32> to vector<1x128x128xf32>
    %15 = vector.broadcast %14 : vector<1x128x128xf32> to vector<2x128x128xf32>
    %16 = arith.mulf %13, %15 : vector<2x128x128xf32>
    %c0_16 = arith.constant 0 : index
    %c0_17 = arith.constant 0 : index
    %c0_18 = arith.constant 0 : index
    %c0_19 = arith.constant 0 : index
    %17 = vector.load %arg8[%c0_16, %c0_17, %c0_18, %c0_19] : memref<2x1x128x128xf32, #tpu.memory_space<vmem>>, vector<2x1x128x128xf32>
    %18 = vector.shape_cast %17 : vector<2x1x128x128xf32> to vector<2x128x128xf32>
    %19 = vector.shape_cast %16 : vector<2x128x128xf32> to vector<2x1x128x128xf32>
    tpu.vector_store %arg8[%c0_16, %c0_17, %c0_18, %c0_19], %19 {strides = array<i32>} : memref<2x1x128x128xf32, #tpu.memory_space<vmem>>, vector<2x1x128x128xf32>,
    %c0_20 = arith.constant 0 : index
    %c0_21 = arith.constant 0 : index
    %c0_22 = arith.constant 0 : index
    %c0_23 = arith.constant 0 : index
    %20 = vector.load %arg7[%c0_20, %c0_21, %c0_22, %c0_23] : memref<2x1x128x32xf32, #tpu.memory_space<vmem>>, vector<2x1x128x32xf32>
    %21 = vector.shape_cast %20 : vector<2x1x128x32xf32> to vector<2x128x32xf32>
    "tpu.trace_start"() <{level = 10 : i32, message = "bqk,bkd->bqd"}> : () -> ()
    %cst_24 = arith.constant dense<0.000000e+00> : vector<2x128x32xf32>
    %22 = tpu.matmul %16, %10, %cst_24 {dimension_numbers = #tpu.dot_dimension_numbers<[2], [1], [1], [2], [0, 0, 0, 1, 1, 2], [0], [0]>} : vector<2x128x128xf32>, vector<2x128x32xf32>, vector<2x128x32xf32> -> vector<2x128x32xf32>
    "tpu.trace_stop"() : () -> ()
    %23 = arith.addf %21, %22 : vector<2x128x32xf32>
    %c0_25 = arith.constant 0 : index
    %c0_26 = arith.constant 0 : index
    %c0_27 = arith.constant 0 : index
    %c0_28 = arith.constant 0 : index
    %24 = vector.load %arg7[%c0_25, %c0_26, %c0_27, %c0_28] : memref<2x1x128x32xf32, #tpu.memory_space<vmem>>, vector<2x1x128x32xf32>
    %25 = vector.shape_cast %24 : vector<2x1x128x32xf32> to vector<2x128x32xf32>
    %26 = vector.shape_cast %23 : vector<2x128x32xf32> to vector<2x1x128x32xf32>
    tpu.vector_store %arg7[%c0_25, %c0_26, %c0_27, %c0_28], %26 {strides = array<i32>} : memref<2x1x128x32xf32, #tpu.memory_space<vmem>>, vector<2x1x128x32xf32>,
    return
  }
  func.func @transform_0(%arg0: i32, %arg1: i32, %arg2: i32) -> (i32, i32, i32, i32) {
    %c0_i32 = arith.constant 0 : i32
    %c0_i32_0 = arith.constant 0 : i32
    %c0_i32_1 = arith.constant 0 : i32
    return %c0_i32, %arg0, %arg1, %c0_i32_0 : i32, i32, i32, i32
  }
  func.func @transform_1(%arg0: i32, %arg1: i32, %arg2: i32) -> (i32, i32, i32, i32) {
    %c0_i32 = arith.constant 0 : i32
    %c0_i32_0 = arith.constant 0 : i32
    %c0_i32_1 = arith.constant 0 : i32
    return %c0_i32, %arg0, %arg2, %c0_i32_0 : i32, i32, i32, i32
  }
  func.func @transform_2(%arg0: i32, %arg1: i32, %arg2: i32) -> (i32, i32, i32, i32) {
    %c0_i32 = arith.constant 0 : i32
    %c0_i32_0 = arith.constant 0 : i32
    %c0_i32_1 = arith.constant 0 : i32
    return %c0_i32, %arg0, %arg2, %c0_i32_0 : i32, i32, i32, i32
  }
  func.func @transform_3(%arg0: i32, %arg1: i32, %arg2: i32) -> (i32, i32, i32) {
    %c0_i32 = arith.constant 0 : i32
    return %arg0, %arg1, %arg2 : i32, i32, i32
  }
  func.func @transform_4(%arg0: i32, %arg1: i32, %arg2: i32) -> (i32, i32, i32, i32) {
    %c0_i32 = arith.constant 0 : i32
    %c0_i32_0 = arith.constant 0 : i32
    %c0_i32_1 = arith.constant 0 : i32
    return %c0_i32, %arg0, %arg1, %c0_i32_0 : i32, i32, i32, i32
  }
  func.func @transform_5(%arg0: i32, %arg1: i32, %arg2: i32) -> (i32, i32, i32, i32) {
    %c0_i32 = arith.constant 0 : i32
    %c0_i32_0 = arith.constant 0 : i32
    return %c0_i32, %arg0, %arg1, %arg2 : i32, i32, i32, i32
  }
}

</mosaic_0001>

<llo_original>
// kernel: tpu_custom_call.1
$region0: #{tpu_custom_call.1}
  #allocation0 [shape = 'u32[]', space=smem, size = 0x4, offset = 0x4, fixed_abs, tag = 'smem constant byte address 0x4 - core index']
  #allocation1 [shape = 'u32[144,128]{1,0:T(1,128)}', space=vmem, size = 0x12000, scoped, tag = 'internal scratch']
  #allocation9 [shape = 's32[]', space=sflag, size = 0x4, offset = 0, fixed_abs, tag = 'sflag constant byte address 0x0 - dummy sync flag']
  %s0 = inlined_call_operand.vmem [shape: f32[2,4,256,32], index: 0, kind: input, shape index: {}]
  %s1 = inlined_call_operand.vmem [shape: f32[2,4,256,32], index: 1, kind: input, shape index: {}]
  %s2 = inlined_call_operand.vmem [shape: f32[2,4,256,32], index: 2, kind: input, shape index: {}]
  %s3 = inlined_call_operand.vmem [shape: f32[4,256,256], index: 3, kind: input, shape index: {}]
  %s4 = inlined_call_operand.vmem [shape: f32[2,4,256,32], index: 4, kind: output, shape index: {0}]
  %s5 = inlined_call_operand.hbm [shape: f32[2,4,256,256], index: 5, kind: output, shape index: {1}]
  %6 = xla_tuple %s4, %s5
  %s7 = sld [smem:[#allocation0]]
  $region247: #{tpu_custom_call.1} parent=0
    _
  %s9 = ssub.s32 1, %s7
  %s10 = scalar_select 0, %s9, %s7
  $region1: #{tpu_custom_call.1} parent=0
    #allocation2 [shape = 'u8[262144]{0}', space=vmem, size = 0x40000, scoped, tag = 'input window, operand 0']
    #allocation3 [shape = 'u8[262144]{0}', space=vmem, size = 0x40000, scoped, tag = 'input window, operand 1']
    #allocation4 [shape = 'u8[262144]{0}', space=vmem, size = 0x40000, scoped, tag = 'input window, operand 2']
    #allocation5 [shape = 'u8[131072]{0}', space=vmem, size = 0x20000, scoped, tag = 'input window, operand 3']
    #allocation6 [shape = 'u8[262144]{0}', space=vmem, size = 0x40000, scoped, tag = 'output window, operand 0']
    #allocation7 [shape = 'u8[262144]{0}', space=vmem, size = 0x40000, scoped, tag = 'output window, operand 1']
    #allocation8 [shape = 's32[2]{0}', space=sflag, size = 0x8, scoped, tag = 'scoped memory for tpu_custom_call.1']
    %11 = vsyncpa [#allocation8], 0
    %s12 = scalar_lea.sflag [#allocation8], 1
    %13 = vsyncpa %s12, 0
    loop: start=0, step=1, limit=18
    $region2: #{tpu_custom_call.1} parent=1 // loop_pre_header
      _
    $region3: #{tpu_custom_call.1} parent=1 // loop_header
      %s15 = sphi 0, %s19
      %p16 = scmp.ge.s32.totalorder %s15, 18
      %s22 = sphi 0, %s41
      %s23 = sphi 0, %s37
      %s24 = sphi 0, %s33
      %s25 = sphi 0, %s22
      %s26 = sphi 0, %s23
      %s27 = sphi 0, %s24
      %s28 = sphi 0, %s25
      %s29 = sphi 0, %s26
      %s30 = sphi 0, %s27
      %s46 = sphi 0, %s48
      %s49 = sphi 0, %s46
      %s50 = sphi 0, %s49
      %s66 = sphi 0, %s50
      %s74 = sphi 0, %s76
      %s77 = sphi 0, %s74
      %s78 = sphi 0, %s77
      %s94 = sphi 0, %s78
      %s102 = sphi 0, %s104
      %s105 = sphi 0, %s102
      %s106 = sphi 0, %s105
      %s122 = sphi 0, %s106
      %s132 = sphi 0, %s134
      %s135 = sphi 0, %s132
      %s136 = sphi 0, %s135
      %s152 = sphi 0, %s136
      %s160 = sphi 0, %s162
      %s163 = sphi 0, %s160
      %s164 = sphi 0, %s163
      %s180 = sphi 0, %s164
      %s190 = sphi 0, %s192
      %s193 = sphi 0, %s190
      %s194 = sphi 0, %s193
      %s210 = sphi 0, %s194
    $region4: #{tpu_custom_call.1} parent=1 // loop_header_branch
      %18 = sbr.rel (%p16) target = $region8
    $region5: #{tpu_custom_call.1} parent=1 // loop_body
      %s20 = ssub.s32 %s15, 1
      %s21 = ssub.s32 %s15, 2
      %s31 = sadd.s32 1, %s24
      %p32 = scmp.ge.s32.totalorder %s31, 2
      %s33 = scalar_select %p32, 0, %s31
      %s34 = sadd.s32 1, %s23
      %s35 = scalar_select %p32, %s34, %s23
      %p36 = scmp.ge.s32.totalorder %s35, 2
      %s37 = scalar_select %p36, 0, %s35
      %s38 = sadd.s32 1, %s22
      %s39 = scalar_select %p36, %s38, %s22
      %p40 = scmp.ge.s32.totalorder %s39, 4
      %s41 = scalar_select %p40, 0, %s39
      %s42 = ssub.s32 %s22, %s41
      %s43 = ssub.s32 %s23, %s37
      %s44 = sor.u32 %s42, %s43
      %p45 = scmp.eq.s32.totalorder %s44, 0
      %s47 = sadd.s32 %s46, 1
      %s48 = scalar_select %p45, %s46, %s47
      %p51 = pneg %p45
      %p52 = scmp.eq.s32.totalorder %s15, 15
      %p53 = por %p51, %p52
      %p54 = scmp.ne.s32.totalorder %s46, %s49
      %p55 = scmp.eq.s32.totalorder %s15, 0
      %p56 = por %p54, %p55
      %p57 = scmp.ne.s32.totalorder %s46, %s49
      %p58 = scmp.eq.s32.totalorder %s20, 15
      %p59 = por %p57, %p58
      %p60 = scmp.ne.s32.totalorder %s49, %s50
      %p61 = scmp.eq.s32.totalorder %s20, 0
      %p62 = por %p60, %p61
      %p63 = scmp.ne.s32.totalorder %s49, %s50
      %p64 = scmp.eq.s32.totalorder %s21, 15
      %p65 = por %p63, %p64
      %p67 = scmp.ne.s32.totalorder %s50, %s66
      %p68 = scmp.eq.s32.totalorder %s21, 0
      %p69 = por %p67, %p68
      %s70 = ssub.s32 %s22, %s41
      %s71 = ssub.s32 %s24, %s33
      %s72 = sor.u32 %s70, %s71
      %p73 = scmp.eq.s32.totalorder %s72, 0
      %s75 = sadd.s32 %s74, 1
      %s76 = scalar_select %p73, %s74, %s75
      %p79 = pneg %p73
      %p80 = scmp.eq.s32.totalorder %s15, 15
      %p81 = por %p79, %p80
      %p82 = scmp.ne.s32.totalorder %s74, %s77
      %p83 = scmp.eq.s32.totalorder %s15, 0
      %p84 = por %p82, %p83
      %p85 = scmp.ne.s32.totalorder %s74, %s77
      %p86 = scmp.eq.s32.totalorder %s20, 15
      %p87 = por %p85, %p86
      %p88 = scmp.ne.s32.totalorder %s77, %s78
      %p89 = scmp.eq.s32.totalorder %s20, 0
      %p90 = por %p88, %p89
      %p91 = scmp.ne.s32.totalorder %s77, %s78
      %p92 = scmp.eq.s32.totalorder %s21, 15
      %p93 = por %p91, %p92
      %p95 = scmp.ne.s32.totalorder %s78, %s94
      %p96 = scmp.eq.s32.totalorder %s21, 0
      %p97 = por %p95, %p96
      %s98 = ssub.s32 %s22, %s41
      %s99 = ssub.s32 %s24, %s33
      %s100 = sor.u32 %s98, %s99
      %p101 = scmp.eq.s32.totalorder %s100, 0
      %s103 = sadd.s32 %s102, 1
      %s104 = scalar_select %p101, %s102, %s103
      %p107 = pneg %p101
      %p108 = scmp.eq.s32.totalorder %s15, 15
      %p109 = por %p107, %p108
      %p110 = scmp.ne.s32.totalorder %s102, %s105
      %p111 = scmp.eq.s32.totalorder %s15, 0
      %p112 = por %p110, %p111
      %p113 = scmp.ne.s32.totalorder %s102, %s105
      %p114 = scmp.eq.s32.totalorder %s20, 15
      %p115 = por %p113, %p114
      %p116 = scmp.ne.s32.totalorder %s105, %s106
      %p117 = scmp.eq.s32.totalorder %s20, 0
      %p118 = por %p116, %p117
      %p119 = scmp.ne.s32.totalorder %s105, %s106
      %p120 = scmp.eq.s32.totalorder %s21, 15
      %p121 = por %p119, %p120
      %p123 = scmp.ne.s32.totalorder %s106, %s122
      %p124 = scmp.eq.s32.totalorder %s21, 0
      %p125 = por %p123, %p124
      %s126 = ssub.s32 %s22, %s41
      %s127 = ssub.s32 %s23, %s37
      %s128 = sor.u32 %s126, %s127
      %s129 = ssub.s32 %s24, %s33
      %s130 = sor.u32 %s128, %s129
      %p131 = scmp.eq.s32.totalorder %s130, 0
      %s133 = sadd.s32 %s132, 1
      %s134 = scalar_select %p131, %s132, %s133
      %p137 = pneg %p131
      %p138 = scmp.eq.s32.totalorder %s15, 15
      %p139 = por %p137, %p138
      %p140 = scmp.ne.s32.totalorder %s132, %s135
      %p141 = scmp.eq.s32.totalorder %s15, 0
      %p142 = por %p140, %p141
      %p143 = scmp.ne.s32.totalorder %s132, %s135
      %p144 = scmp.eq.s32.totalorder %s20, 15
      %p145 = por %p143, %p144
      %p146 = scmp.ne.s32.totalorder %s135, %s136
      %p147 = scmp.eq.s32.totalorder %s20, 0
      %p148 = por %p146, %p147
      %p149 = scmp.ne.s32.totalorder %s135, %s136
      %p150 = scmp.eq.s32.totalorder %s21, 15
      %p151 = por %p149, %p150
      %p153 = scmp.ne.s32.totalorder %s136, %s152
      %p154 = scmp.eq.s32.totalorder %s21, 0
      %p155 = por %p153, %p154
      %s156 = ssub.s32 %s22, %s41
      %s157 = ssub.s32 %s23, %s37
      %s158 = sor.u32 %s156, %s157
      %p159 = scmp.eq.s32.totalorder %s158, 0
      %s161 = sadd.s32 %s160, 1
      %s162 = scalar_select %p159, %s160, %s161
      %p165 = pneg %p159
      %p166 = scmp.eq.s32.totalorder %s15, 15
      %p167 = por %p165, %p166
      %p168 = scmp.ne.s32.totalorder %s160, %s163
      %p169 = scmp.eq.s32.totalorder %s15, 0
      %p170 = por %p168, %p169
      %p171 = scmp.ne.s32.totalorder %s160, %s163
      %p172 = scmp.eq.s32.totalorder %s20, 15
      %p173 = por %p171, %p172
      %p174 = scmp.ne.s32.totalorder %s163, %s164
      %p175 = scmp.eq.s32.totalorder %s20, 0
      %p176 = por %p174, %p175
      %p177 = scmp.ne.s32.totalorder %s163, %s164
      %p178 = scmp.eq.s32.totalorder %s21, 15
      %p179 = por %p177, %p178
      %p181 = scmp.ne.s32.totalorder %s164, %s180
      %p182 = scmp.eq.s32.totalorder %s21, 0
      %p183 = por %p181, %p182
      %s184 = ssub.s32 %s22, %s41
      %s185 = ssub.s32 %s23, %s37
      %s186 = sor.u32 %s184, %s185
      %s187 = ssub.s32 %s24, %s33
      %s188 = sor.u32 %s186, %s187
      %p189 = scmp.eq.s32.totalorder %s188, 0
      %s191 = sadd.s32 %s190, 1
      %s192 = scalar_select %p189, %s190, %s191
      %p195 = pneg %p189
      %p196 = scmp.eq.s32.totalorder %s15, 15
      %p197 = por %p195, %p196
      %p198 = scmp.ne.s32.totalorder %s190, %s193
      %p199 = scmp.eq.s32.totalorder %s15, 0
      %p200 = por %p198, %p199
      %p201 = scmp.ne.s32.totalorder %s190, %s193
      %p202 = scmp.eq.s32.totalorder %s20, 15
      %p203 = por %p201, %p202
      %p204 = scmp.ne.s32.totalorder %s193, %s194
      %p205 = scmp.eq.s32.totalorder %s20, 0
      %p206 = por %p204, %p205
      %p207 = scmp.ne.s32.totalorder %s193, %s194
      %p208 = scmp.eq.s32.totalorder %s21, 15
      %p209 = por %p207, %p208
      %p211 = scmp.ne.s32.totalorder %s194, %s210
      %p212 = scmp.eq.s32.totalorder %s21, 0
      %p213 = por %p211, %p212
      %p214 = scmp.le.s32.totalorder 1, %s15
      %p215 = scmp.lt.s32.totalorder %s15, 17
      %p216 = pnand %p214, %p215
      %p217 = pneg %p216
      // Predicated region
      $region9: #{tpu_custom_call.1} parent=5 // pred_check
        _
      $region10: #{tpu_custom_call.1} parent=5 // pred_check_branch
        %219 = sbr.rel (%p216) target = $region12
      $region11: #{tpu_custom_call.1} parent=5 // pred_region
        %s220 = ssub.s32 %s15, 1
      $region12: #{tpu_custom_call.1} parent=5 // pred_fallthru
        _
      %p221 = scmp.lt.s32.totalorder %s15, 16
      // Predicated region
      $region13: #{tpu_custom_call.1} parent=5 // pred_check
        %p222 = pneg %p221
      $region14: #{tpu_custom_call.1} parent=5 // pred_check_branch
        %224 = sbr.rel (%p222) target = $region16
      $region15: #{tpu_custom_call.1} parent=5 // pred_region
        // Predicated region
        $region17: #{tpu_custom_call.1} parent=15 // pred_check
          %p225 = pneg %p56
        $region18: #{tpu_custom_call.1} parent=15 // pred_check_branch
          %227 = sbr.rel (%p225) target = $region20
        $region19: #{tpu_custom_call.1} parent=15 // pred_region
          %s228 = sand.u32 %s46, 1
          %s229 = sand.u32 %s46, 1
          %s230 = smul.addr %s229, 256
          %s231 = scalar_lea.vmem [#allocation2], %s230
          %s232 = smul.u32 16, %s23
          %s233 = smul.addr %s22, 32
          %s234 = sadd.s32 %s232, %s233
          %s235 = smul.addr %s234, 8
          %s236 = scalar_lea.vmem %s0, %s235
          // Predicated region
          $region21: #{tpu_custom_call.1} parent=19 // pred_check
            _
          $region22: #{tpu_custom_call.1} parent=19 // pred_check_branch
            %238 = sbr.rel (0) target = $region24
          $region23: #{tpu_custom_call.1} parent=19 // pred_region
            // Predicated region
            $region25: #{tpu_custom_call.1} parent=23 // pred_check
              _
            $region26: #{tpu_custom_call.1} parent=23 // pred_check_branch
              %240 = sbr.rel (0) target = $region28
            $region27: #{tpu_custom_call.1} parent=23 // pred_region
              // Predicated region
              $region40: #{tpu_custom_call.1} parent=27 // pred_check
                _
              $region41: #{tpu_custom_call.1} parent=27 // pred_check_branch
                %317 = sbr.rel (0) target = $region43
              $region42: #{tpu_custom_call.1} parent=27 // pred_region
                loop: start=0, step=1, limit=1
                $region44: #{tpu_custom_call.1} parent=42 // loop_pre_header
                  _
                $region45: #{tpu_custom_call.1} parent=42 // loop_header
                  %s319 = sphi 0, %s323
                  %p320 = scmp.ge.s32.totalorder %s319, 1
                  %s324 = sphi %s236, %s236
                  %s325 = sphi %s231, %s231
                $region46: #{tpu_custom_call.1} parent=42 // loop_header_branch
                  %322 = sbr.rel (%p320) target = $region50
                $region47: #{tpu_custom_call.1} parent=42 // loop_body
                  %v326 = vld [vmem:[%s324] sm:$0xff]
                  %327 = vst [vmem:[%s325] sm:$0xff] %v326
                  %v328 = vld [vmem:[%s324 + $0x8] sm:$0xff]
                  %329 = vst [vmem:[%s325 + $0x8] sm:$0xff] %v328
                  %v330 = vld [vmem:[%s324 + $0x10] sm:$0xff]
                  %331 = vst [vmem:[%s325 + $0x10] sm:$0xff] %v330
                  %v332 = vld [vmem:[%s324 + $0x18] sm:$0xff]
                  %333 = vst [vmem:[%s325 + $0x18] sm:$0xff] %v332
                  %v334 = vld [vmem:[%s324 + $0x20] sm:$0xff]
                  %335 = vst [vmem:[%s325 + $0x20] sm:$0xff] %v334
                  %v336 = vld [vmem:[%s324 + $0x28] sm:$0xff]
                  %337 = vst [vmem:[%s325 + $0x28] sm:$0xff] %v336
                  %v338 = vld [vmem:[%s324 + $0x30] sm:$0xff]
                  %339 = vst [vmem:[%s325 + $0x30] sm:$0xff] %v338
                  %v340 = vld [vmem:[%s324 + $0x38] sm:$0xff]
                  %341 = vst [vmem:[%s325 + $0x38] sm:$0xff] %v340
                  %v342 = vld [vmem:[%s324 + $0x40] sm:$0xff]
                  %343 = vst [vmem:[%s325 + $0x40] sm:$0xff] %v342
                  %v344 = vld [vmem:[%s324 + $0x48] sm:$0xff]
                  %345 = vst [vmem:[%s325 + $0x48] sm:$0xff] %v344
                  %v346 = vld [vmem:[%s324 + $0x50] sm:$0xff]
                  %347 = vst [vmem:[%s325 + $0x50] sm:$0xff] %v346
                  %v348 = vld [vmem:[%s324 + $0x58] sm:$0xff]
                  %349 = vst [vmem:[%s325 + $0x58] sm:$0xff] %v348
                  %v350 = vld [vmem:[%s324 + $0x60] sm:$0xff]
                  %351 = vst [vmem:[%s325 + $0x60] sm:$0xff] %v350
                  %v352 = vld [vmem:[%s324 + $0x68] sm:$0xff]
                  %353 = vst [vmem:[%s325 + $0x68] sm:$0xff] %v352
                  %v354 = vld [vmem:[%s324 + $0x70] sm:$0xff]
                  %355 = vst [vmem:[%s325 + $0x70] sm:$0xff] %v354
                  %v356 = vld [vmem:[%s324 + $0x78] sm:$0xff]
                  %357 = vst [vmem:[%s325 + $0x78] sm:$0xff] %v356
                  %v358 = vld [vmem:[%s324 + $0x400] sm:$0xff]
                  %359 = vst [vmem:[%s325 + $0x80] sm:$0xff] %v358
                  %v360 = vld [vmem:[%s324 + $0x408] sm:$0xff]
                  %361 = vst [vmem:[%s325 + $0x88] sm:$0xff] %v360
                  %v362 = vld [vmem:[%s324 + $0x410] sm:$0xff]
                  %363 = vst [vmem:[%s325 + $0x90] sm:$0xff] %v362
                  %v364 = vld [vmem:[%s324 + $0x418] sm:$0xff]
                  %365 = vst [vmem:[%s325 + $0x98] sm:$0xff] %v364
                  %v366 = vld [vmem:[%s324 + $0x420] sm:$0xff]
                  %367 = vst [vmem:[%s325 + $0xa0] sm:$0xff] %v366
                  %v368 = vld [vmem:[%s324 + $0x428] sm:$0xff]
                  %369 = vst [vmem:[%s325 + $0xa8] sm:$0xff] %v368
                  %v370 = vld [vmem:[%s324 + $0x430] sm:$0xff]
                  %371 = vst [vmem:[%s325 + $0xb0] sm:$0xff] %v370
                  %v372 = vld [vmem:[%s324 + $0x438] sm:$0xff]
                  %373 = vst [vmem:[%s325 + $0xb8] sm:$0xff] %v372
                  %v374 = vld [vmem:[%s324 + $0x440] sm:$0xff]
                  %375 = vst [vmem:[%s325 + $0xc0] sm:$0xff] %v374
                  %v376 = vld [vmem:[%s324 + $0x448] sm:$0xff]
                  %377 = vst [vmem:[%s325 + $0xc8] sm:$0xff] %v376
                  %v378 = vld [vmem:[%s324 + $0x450] sm:$0xff]
                  %379 = vst [vmem:[%s325 + $0xd0] sm:$0xff] %v378
                  %v380 = vld [vmem:[%s324 + $0x458] sm:$0xff]
                  %381 = vst [vmem:[%s325 + $0xd8] sm:$0xff] %v380
                  %v382 = vld [vmem:[%s324 + $0x460] sm:$0xff]
                  %383 = vst [vmem:[%s325 + $0xe0] sm:$0xff] %v382
                  %v384 = vld [vmem:[%s324 + $0x468] sm:$0xff]
                  %385 = vst [vmem:[%s325 + $0xe8] sm:$0xff] %v384
                  %v386 = vld [vmem:[%s324 + $0x470] sm:$0xff]
                  %387 = vst [vmem:[%s325 + $0xf0] sm:$0xff] %v386
                  %v388 = vld [vmem:[%s324 + $0x478] sm:$0xff]
                  %389 = vst [vmem:[%s325 + $0xf8] sm:$0xff] %v388
                $region48: #{tpu_custom_call.1} parent=42 // loop_footer
                  %s323 = sadd.s32 1, %s319
                $region49: #{tpu_custom_call.1} parent=42 // loop_footer_branch
                  %318 = sbr.rel target = $region45
                $region50: #{tpu_custom_call.1} parent=42 // loop_exit
                  _
              $region43: #{tpu_custom_call.1} parent=27 // pred_fallthru
                _
              // Predicated region
              $region51: #{tpu_custom_call.1} parent=27 // pred_check
                _
              $region52: #{tpu_custom_call.1} parent=27 // pred_check_branch
                %391 = sbr.rel target = $region54
              $region53: #{tpu_custom_call.1} parent=27 // pred_region
                _
              $region54: #{tpu_custom_call.1} parent=27 // pred_fallthru
                _
            $region28: #{tpu_custom_call.1} parent=23 // pred_fallthru
              _
            // Predicated region
            $region29: #{tpu_custom_call.1} parent=23 // pred_check
              _
            $region30: #{tpu_custom_call.1} parent=23 // pred_check_branch
              %242 = sbr.rel target = $region32
            $region31: #{tpu_custom_call.1} parent=23 // pred_region
              loop: start=0, step=1, limit=1
              $region33: #{tpu_custom_call.1} parent=31 // loop_pre_header
                _
              $region34: #{tpu_custom_call.1} parent=31 // loop_header
                %s245 = sphi 0, %s249
                %p246 = scmp.ge.s32.totalorder %s245, 1
                %s250 = sphi %s236, %s236
                %s251 = sphi %s231, %s231
              $region35: #{tpu_custom_call.1} parent=31 // loop_header_branch
                %248 = sbr.rel (%p246) target = $region39
              $region36: #{tpu_custom_call.1} parent=31 // loop_body
                %v252 = vld [vmem:[%s250] sm:$0xff]
                %253 = vst [vmem:[%s251] sm:$0xff] %v252
                %v254 = vld [vmem:[%s250 + $0x8] sm:$0xff]
                %255 = vst [vmem:[%s251 + $0x8] sm:$0xff] %v254
                %v256 = vld [vmem:[%s250 + $0x10] sm:$0xff]
                %257 = vst [vmem:[%s251 + $0x10] sm:$0xff] %v256
                %v258 = vld [vmem:[%s250 + $0x18] sm:$0xff]
                %259 = vst [vmem:[%s251 + $0x18] sm:$0xff] %v258
                %v260 = vld [vmem:[%s250 + $0x20] sm:$0xff]
                %261 = vst [vmem:[%s251 + $0x20] sm:$0xff] %v260
                %v262 = vld [vmem:[%s250 + $0x28] sm:$0xff]
                %263 = vst [vmem:[%s251 + $0x28] sm:$0xff] %v262
                %v264 = vld [vmem:[%s250 + $0x30] sm:$0xff]
                %265 = vst [vmem:[%s251 + $0x30] sm:$0xff] %v264
                %v266 = vld [vmem:[%s250 + $0x38] sm:$0xff]
                %267 = vst [vmem:[%s251 + $0x38] sm:$0xff] %v266
                %v268 = vld [vmem:[%s250 + $0x40] sm:$0xff]
                %269 = vst [vmem:[%s251 + $0x40] sm:$0xff] %v268
                %v270 = vld [vmem:[%s250 + $0x48] sm:$0xff]
                %271 = vst [vmem:[%s251 + $0x48] sm:$0xff] %v270
                %v272 = vld [vmem:[%s250 + $0x50] sm:$0xff]
                %273 = vst [vmem:[%s251 + $0x50] sm:$0xff] %v272
                %v274 = vld [vmem:[%s250 + $0x58] sm:$0xff]
                %275 = vst [vmem:[%s251 + $0x58] sm:$0xff] %v274
                %v276 = vld [vmem:[%s250 + $0x60] sm:$0xff]
                %277 = vst [vmem:[%s251 + $0x60] sm:$0xff] %v276
                %v278 = vld [vmem:[%s250 + $0x68] sm:$0xff]
                %279 = vst [vmem:[%s251 + $0x68] sm:$0xff] %v278
                %v280 = vld [vmem:[%s250 + $0x70] sm:$0xff]
                %281 = vst [vmem:[%s251 + $0x70] sm:$0xff] %v280
                %v282 = vld [vmem:[%s250 + $0x78] sm:$0xff]
                %283 = vst [vmem:[%s251 + $0x78] sm:$0xff] %v282
                %v284 = vld [vmem:[%s250 + $0x400] sm:$0xff]
                %285 = vst [vmem:[%s251 + $0x80] sm:$0xff] %v284
                %v286 = vld [vmem:[%s250 + $0x408] sm:$0xff]
                %287 = vst [vmem:[%s251 + $0x88] sm:$0xff] %v286
                %v288 = vld [vmem:[%s250 + $0x410] sm:$0xff]
                %289 = vst [vmem:[%s251 + $0x90] sm:$0xff] %v288
                %v290 = vld [vmem:[%s250 + $0x418] sm:$0xff]
                %291 = vst [vmem:[%s251 + $0x98] sm:$0xff] %v290
                %v292 = vld [vmem:[%s250 + $0x420] sm:$0xff]
                %293 = vst [vmem:[%s251 + $0xa0] sm:$0xff] %v292
                %v294 = vld [vmem:[%s250 + $0x428] sm:$0xff]
                %295 = vst [vmem:[%s251 + $0xa8] sm:$0xff] %v294
                %v296 = vld [vmem:[%s250 + $0x430] sm:$0xff]
                %297 = vst [vmem:[%s251 + $0xb0] sm:$0xff] %v296
                %v298 = vld [vmem:[%s250 + $0x438] sm:$0xff]
                %299 = vst [vmem:[%s251 + $0xb8] sm:$0xff] %v298
                %v300 = vld [vmem:[%s250 + $0x440] sm:$0xff]
                %301 = vst [vmem:[%s251 + $0xc0] sm:$0xff] %v300
                %v302 = vld [vmem:[%s250 + $0x448] sm:$0xff]
                %303 = vst [vmem:[%s251 + $0xc8] sm:$0xff] %v302
                %v304 = vld [vmem:[%s250 + $0x450] sm:$0xff]
                %305 = vst [vmem:[%s251 + $0xd0] sm:$0xff] %v304
                %v306 = vld [vmem:[%s250 + $0x458] sm:$0xff]
                %307 = vst [vmem:[%s251 + $0xd8] sm:$0xff] %v306
                %v308 = vld [vmem:[%s250 + $0x460] sm:$0xff]
                %309 = vst [vmem:[%s251 + $0xe0] sm:$0xff] %v308
                %v310 = vld [vmem:[%s250 + $0x468] sm:$0xff]
                %311 = vst [vmem:[%s251 + $0xe8] sm:$0xff] %v310
                %v312 = vld [vmem:[%s250 + $0x470] sm:$0xff]
                %313 = vst [vmem:[%s251 + $0xf0] sm:$0xff] %v312
                %v314 = vld [vmem:[%s250 + $0x478] sm:$0xff]
                %315 = vst [vmem:[%s251 + $0xf8] sm:$0xff] %v314
              $region37: #{tpu_custom_call.1} parent=31 // loop_footer
                %s249 = sadd.s32 1, %s245
              $region38: #{tpu_custom_call.1} parent=31 // loop_footer_branch
                %244 = sbr.rel target = $region34
              $region39: #{tpu_custom_call.1} parent=31 // loop_exit
                _
            $region32: #{tpu_custom_call.1} parent=23 // pred_fallthru
              _
          $region24: #{tpu_custom_call.1} parent=19 // pred_fallthru
            _
          %392 = vnop
        $region20: #{tpu_custom_call.1} parent=15 // pred_fallthru
          _
        // Predicated region
        $region55: #{tpu_custom_call.1} parent=15 // pred_check
          %p393 = pneg %p84
        $region56: #{tpu_custom_call.1} parent=15 // pred_check_branch
          %395 = sbr.rel (%p393) target = $region58
        $region57: #{tpu_custom_call.1} parent=15 // pred_region
          %s396 = sand.u32 %s74, 1
          %s397 = sand.u32 %s74, 1
          %s398 = smul.addr %s397, 256
          %s399 = scalar_lea.vmem [#allocation3], %s398
          %s400 = smul.u32 16, %s24
          %s401 = smul.addr %s22, 32
          %s402 = sadd.s32 %s400, %s401
          %s403 = smul.addr %s402, 8
          %s404 = scalar_lea.vmem %s1, %s403
          // Predicated region
          $region59: #{tpu_custom_call.1} parent=57 // pred_check
            _
          $region60: #{tpu_custom_call.1} parent=57 // pred_check_branch
            %406 = sbr.rel (0) target = $region62
          $region61: #{tpu_custom_call.1} parent=57 // pred_region
            // Predicated region
            $region63: #{tpu_custom_call.1} parent=61 // pred_check
              _
            $region64: #{tpu_custom_call.1} parent=61 // pred_check_branch
              %408 = sbr.rel (0) target = $region66
            $region65: #{tpu_custom_call.1} parent=61 // pred_region
              // Predicated region
              $region78: #{tpu_custom_call.1} parent=65 // pred_check
                _
              $region79: #{tpu_custom_call.1} parent=65 // pred_check_branch
                %485 = sbr.rel (0) target = $region81
              $region80: #{tpu_custom_call.1} parent=65 // pred_region
                loop: start=0, step=1, limit=1
                $region82: #{tpu_custom_call.1} parent=80 // loop_pre_header
                  _
                $region83: #{tpu_custom_call.1} parent=80 // loop_header
                  %s487 = sphi 0, %s491
                  %p488 = scmp.ge.s32.totalorder %s487, 1
                  %s492 = sphi %s404, %s404
                  %s493 = sphi %s399, %s399
                $region84: #{tpu_custom_call.1} parent=80 // loop_header_branch
                  %490 = sbr.rel (%p488) target = $region88
                $region85: #{tpu_custom_call.1} parent=80 // loop_body
                  %v494 = vld [vmem:[%s492] sm:$0xff]
                  %495 = vst [vmem:[%s493] sm:$0xff] %v494
                  %v496 = vld [vmem:[%s492 + $0x8] sm:$0xff]
                  %497 = vst [vmem:[%s493 + $0x8] sm:$0xff] %v496
                  %v498 = vld [vmem:[%s492 + $0x10] sm:$0xff]
                  %499 = vst [vmem:[%s493 + $0x10] sm:$0xff] %v498
                  %v500 = vld [vmem:[%s492 + $0x18] sm:$0xff]
                  %501 = vst [vmem:[%s493 + $0x18] sm:$0xff] %v500
                  %v502 = vld [vmem:[%s492 + $0x20] sm:$0xff]
                  %503 = vst [vmem:[%s493 + $0x20] sm:$0xff] %v502
                  %v504 = vld [vmem:[%s492 + $0x28] sm:$0xff]
                  %505 = vst [vmem:[%s493 + $0x28] sm:$0xff] %v504
                  %v506 = vld [vmem:[%s492 + $0x30] sm:$0xff]
                  %507 = vst [vmem:[%s493 + $0x30] sm:$0xff] %v506
                  %v508 = vld [vmem:[%s492 + $0x38] sm:$0xff]
                  %509 = vst [vmem:[%s493 + $0x38] sm:$0xff] %v508
                  %v510 = vld [vmem:[%s492 + $0x40] sm:$0xff]
                  %511 = vst [vmem:[%s493 + $0x40] sm:$0xff] %v510
                  %v512 = vld [vmem:[%s492 + $0x48] sm:$0xff]
                  %513 = vst [vmem:[%s493 + $0x48] sm:$0xff] %v512
                  %v514 = vld [vmem:[%s492 + $0x50] sm:$0xff]
                  %515 = vst [vmem:[%s493 + $0x50] sm:$0xff] %v514
                  %v516 = vld [vmem:[%s492 + $0x58] sm:$0xff]
                  %517 = vst [vmem:[%s493 + $0x58] sm:$0xff] %v516
                  %v518 = vld [vmem:[%s492 + $0x60] sm:$0xff]
                  %519 = vst [vmem:[%s493 + $0x60] sm:$0xff] %v518
                  %v520 = vld [vmem:[%s492 + $0x68] sm:$0xff]
                  %521 = vst [vmem:[%s493 + $0x68] sm:$0xff] %v520
                  %v522 = vld [vmem:[%s492 + $0x70] sm:$0xff]
                  %523 = vst [vmem:[%s493 + $0x70] sm:$0xff] %v522
                  %v524 = vld [vmem:[%s492 + $0x78] sm:$0xff]
                  %525 = vst [vmem:[%s493 + $0x78] sm:$0xff] %v524
                  %v526 = vld [vmem:[%s492 + $0x400] sm:$0xff]
                  %527 = vst [vmem:[%s493 + $0x80] sm:$0xff] %v526
                  %v528 = vld [vmem:[%s492 + $0x408] sm:$0xff]
                  %529 = vst [vmem:[%s493 + $0x88] sm:$0xff] %v528
                  %v530 = vld [vmem:[%s492 + $0x410] sm:$0xff]
                  %531 = vst [vmem:[%s493 + $0x90] sm:$0xff] %v530
                  %v532 = vld [vmem:[%s492 + $0x418] sm:$0xff]
                  %533 = vst [vmem:[%s493 + $0x98] sm:$0xff] %v532
                  %v534 = vld [vmem:[%s492 + $0x420] sm:$0xff]
                  %535 = vst [vmem:[%s493 + $0xa0] sm:$0xff] %v534
                  %v536 = vld [vmem:[%s492 + $0x428] sm:$0xff]
                  %537 = vst [vmem:[%s493 + $0xa8] sm:$0xff] %v536
                  %v538 = vld [vmem:[%s492 + $0x430] sm:$0xff]
                  %539 = vst [vmem:[%s493 + $0xb0] sm:$0xff] %v538
                  %v540 = vld [vmem:[%s492 + $0x438] sm:$0xff]
                  %541 = vst [vmem:[%s493 + $0xb8] sm:$0xff] %v540
                  %v542 = vld [vmem:[%s492 + $0x440] sm:$0xff]
                  %543 = vst [vmem:[%s493 + $0xc0] sm:$0xff] %v542
                  %v544 = vld [vmem:[%s492 + $0x448] sm:$0xff]
                  %545 = vst [vmem:[%s493 + $0xc8] sm:$0xff] %v544
                  %v546 = vld [vmem:[%s492 + $0x450] sm:$0xff]
                  %547 = vst [vmem:[%s493 + $0xd0] sm:$0xff] %v546
                  %v548 = vld [vmem:[%s492 + $0x458] sm:$0xff]
                  %549 = vst [vmem:[%s493 + $0xd8] sm:$0xff] %v548
                  %v550 = vld [vmem:[%s492 + $0x460] sm:$0xff]
                  %551 = vst [vmem:[%s493 + $0xe0] sm:$0xff] %v550
                  %v552 = vld [vmem:[%s492 + $0x468] sm:$0xff]
                  %553 = vst [vmem:[%s493 + $0xe8] sm:$0xff] %v552
                  %v554 = vld [vmem:[%s492 + $0x470] sm:$0xff]
                  %555 = vst [vmem:[%s493 + $0xf0] sm:$0xff] %v554
                  %v556 = vld [vmem:[%s492 + $0x478] sm:$0xff]
                  %557 = vst [vmem:[%s493 + $0xf8] sm:$0xff] %v556
                $region86: #{tpu_custom_call.1} parent=80 // loop_footer
                  %s491 = sadd.s32 1, %s487
                $region87: #{tpu_custom_call.1} parent=80 // loop_footer_branch
                  %486 = sbr.rel target = $region83
                $region88: #{tpu_custom_call.1} parent=80 // loop_exit
                  _
              $region81: #{tpu_custom_call.1} parent=65 // pred_fallthru
                _
              // Predicated region
              $region89: #{tpu_custom_call.1} parent=65 // pred_check
                _
              $region90: #{tpu_custom_call.1} parent=65 // pred_check_branch
                %559 = sbr.rel target = $region92
              $region91: #{tpu_custom_call.1} parent=65 // pred_region
                _
              $region92: #{tpu_custom_call.1} parent=65 // pred_fallthru
                _
            $region66: #{tpu_custom_call.1} parent=61 // pred_fallthru
              _
            // Predicated region
            $region67: #{tpu_custom_call.1} parent=61 // pred_check
              _
            $region68: #{tpu_custom_call.1} parent=61 // pred_check_branch
              %410 = sbr.rel target = $region70
            $region69: #{tpu_custom_call.1} parent=61 // pred_region
              loop: start=0, step=1, limit=1
              $region71: #{tpu_custom_call.1} parent=69 // loop_pre_header
                _
              $region72: #{tpu_custom_call.1} parent=69 // loop_header
                %s413 = sphi 0, %s417
                %p414 = scmp.ge.s32.totalorder %s413, 1
                %s418 = sphi %s404, %s404
                %s419 = sphi %s399, %s399
              $region73: #{tpu_custom_call.1} parent=69 // loop_header_branch
                %416 = sbr.rel (%p414) target = $region77
              $region74: #{tpu_custom_call.1} parent=69 // loop_body
                %v420 = vld [vmem:[%s418] sm:$0xff]
                %421 = vst [vmem:[%s419] sm:$0xff] %v420
                %v422 = vld [vmem:[%s418 + $0x8] sm:$0xff]
                %423 = vst [vmem:[%s419 + $0x8] sm:$0xff] %v422
                %v424 = vld [vmem:[%s418 + $0x10] sm:$0xff]
                %425 = vst [vmem:[%s419 + $0x10] sm:$0xff] %v424
                %v426 = vld [vmem:[%s418 + $0x18] sm:$0xff]
                %427 = vst [vmem:[%s419 + $0x18] sm:$0xff] %v426
                %v428 = vld [vmem:[%s418 + $0x20] sm:$0xff]
                %429 = vst [vmem:[%s419 + $0x20] sm:$0xff] %v428
                %v430 = vld [vmem:[%s418 + $0x28] sm:$0xff]
                %431 = vst [vmem:[%s419 + $0x28] sm:$0xff] %v430
                %v432 = vld [vmem:[%s418 + $0x30] sm:$0xff]
                %433 = vst [vmem:[%s419 + $0x30] sm:$0xff] %v432
                %v434 = vld [vmem:[%s418 + $0x38] sm:$0xff]
                %435 = vst [vmem:[%s419 + $0x38] sm:$0xff] %v434
                %v436 = vld [vmem:[%s418 + $0x40] sm:$0xff]
                %437 = vst [vmem:[%s419 + $0x40] sm:$0xff] %v436
                %v438 = vld [vmem:[%s418 + $0x48] sm:$0xff]
                %439 = vst [vmem:[%s419 + $0x48] sm:$0xff] %v438
                %v440 = vld [vmem:[%s418 + $0x50] sm:$0xff]
                %441 = vst [vmem:[%s419 + $0x50] sm:$0xff] %v440
                %v442 = vld [vmem:[%s418 + $0x58] sm:$0xff]
                %443 = vst [vmem:[%s419 + $0x58] sm:$0xff] %v442
                %v444 = vld [vmem:[%s418 + $0x60] sm:$0xff]
                %445 = vst [vmem:[%s419 + $0x60] sm:$0xff] %v444
                %v446 = vld [vmem:[%s418 + $0x68] sm:$0xff]
                %447 = vst [vmem:[%s419 + $0x68] sm:$0xff] %v446
                %v448 = vld [vmem:[%s418 + $0x70] sm:$0xff]
                %449 = vst [vmem:[%s419 + $0x70] sm:$0xff] %v448
                %v450 = vld [vmem:[%s418 + $0x78] sm:$0xff]
                %451 = vst [vmem:[%s419 + $0x78] sm:$0xff] %v450
                %v452 = vld [vmem:[%s418 + $0x400] sm:$0xff]
                %453 = vst [vmem:[%s419 + $0x80] sm:$0xff] %v452
                %v454 = vld [vmem:[%s418 + $0x408] sm:$0xff]
                %455 = vst [vmem:[%s419 + $0x88] sm:$0xff] %v454
                %v456 = vld [vmem:[%s418 + $0x410] sm:$0xff]
                %457 = vst [vmem:[%s419 + $0x90] sm:$0xff] %v456
                %v458 = vld [vmem:[%s418 + $0x418] sm:$0xff]
                %459 = vst [vmem:[%s419 + $0x98] sm:$0xff] %v458
                %v460 = vld [vmem:[%s418 + $0x420] sm:$0xff]
                %461 = vst [vmem:[%s419 + $0xa0] sm:$0xff] %v460
                %v462 = vld [vmem:[%s418 + $0x428] sm:$0xff]
                %463 = vst [vmem:[%s419 + $0xa8] sm:$0xff] %v462
                %v464 = vld [vmem:[%s418 + $0x430] sm:$0xff]
                %465 = vst [vmem:[%s419 + $0xb0] sm:$0xff] %v464
                %v466 = vld [vmem:[%s418 + $0x438] sm:$0xff]
                %467 = vst [vmem:[%s419 + $0xb8] sm:$0xff] %v466
                %v468 = vld [vmem:[%s418 + $0x440] sm:$0xff]
                %469 = vst [vmem:[%s419 + $0xc0] sm:$0xff] %v468
                %v470 = vld [vmem:[%s418 + $0x448] sm:$0xff]
                %471 = vst [vmem:[%s419 + $0xc8] sm:$0xff] %v470
                %v472 = vld [vmem:[%s418 + $0x450] sm:$0xff]
                %473 = vst [vmem:[%s419 + $0xd0] sm:$0xff] %v472
                %v474 = vld [vmem:[%s418 + $0x458] sm:$0xff]
                %475 = vst [vmem:[%s419 + $0xd8] sm:$0xff] %v474
                %v476 = vld [vmem:[%s418 + $0x460] sm:$0xff]
                %477 = vst [vmem:[%s419 + $0xe0] sm:$0xff] %v476
                %v478 = vld [vmem:[%s418 + $0x468] sm:$0xff]
                %479 = vst [vmem:[%s419 + $0xe8] sm:$0xff] %v478
                %v480 = vld [vmem:[%s418 + $0x470] sm:$0xff]
                %481 = vst [vmem:[%s419 + $0xf0] sm:$0xff] %v480
                %v482 = vld [vmem:[%s418 + $0x478] sm:$0xff]
                %483 = vst [vmem:[%s419 + $0xf8] sm:$0xff] %v482
              $region75: #{tpu_custom_call.1} parent=69 // loop_footer
                %s417 = sadd.s32 1, %s413
              $region76: #{tpu_custom_call.1} parent=69 // loop_footer_branch
                %412 = sbr.rel target = $region72
              $region77: #{tpu_custom_call.1} parent=69 // loop_exit
                _
            $region70: #{tpu_custom_call.1} parent=61 // pred_fallthru
              _
          $region62: #{tpu_custom_call.1} parent=57 // pred_fallthru
            _
          %560 = vnop
        $region58: #{tpu_custom_call.1} parent=15 // pred_fallthru
          _
        // Predicated region
        $region93: #{tpu_custom_call.1} parent=15 // pred_check
          %p561 = pneg %p112
        $region94: #{tpu_custom_call.1} parent=15 // pred_check_branch
          %563 = sbr.rel (%p561) target = $region96
        $region95: #{tpu_custom_call.1} parent=15 // pred_region
          %s564 = sand.u32 %s102, 1
          %s565 = sand.u32 %s102, 1
          %s566 = smul.addr %s565, 256
          %s567 = scalar_lea.vmem [#allocation4], %s566
          %s568 = smul.u32 16, %s24
          %s569 = smul.addr %s22, 32
          %s570 = sadd.s32 %s568, %s569
          %s571 = smul.addr %s570, 8
          %s572 = scalar_lea.vmem %s2, %s571
          // Predicated region
          $region97: #{tpu_custom_call.1} parent=95 // pred_check
            _
          $region98: #{tpu_custom_call.1} parent=95 // pred_check_branch
            %574 = sbr.rel (0) target = $region100
          $region99: #{tpu_custom_call.1} parent=95 // pred_region
            // Predicated region
            $region101: #{tpu_custom_call.1} parent=99 // pred_check
              _
            $region102: #{tpu_custom_call.1} parent=99 // pred_check_branch
              %576 = sbr.rel (0) target = $region104
            $region103: #{tpu_custom_call.1} parent=99 // pred_region
              // Predicated region
              $region116: #{tpu_custom_call.1} parent=103 // pred_check
                _
              $region117: #{tpu_custom_call.1} parent=103 // pred_check_branch
                %653 = sbr.rel (0) target = $region119
              $region118: #{tpu_custom_call.1} parent=103 // pred_region
                loop: start=0, step=1, limit=1
                $region120: #{tpu_custom_call.1} parent=118 // loop_pre_header
                  _
                $region121: #{tpu_custom_call.1} parent=118 // loop_header
                  %s655 = sphi 0, %s659
                  %p656 = scmp.ge.s32.totalorder %s655, 1
                  %s660 = sphi %s572, %s572
                  %s661 = sphi %s567, %s567
                $region122: #{tpu_custom_call.1} parent=118 // loop_header_branch
                  %658 = sbr.rel (%p656) target = $region126
                $region123: #{tpu_custom_call.1} parent=118 // loop_body
                  %v662 = vld [vmem:[%s660] sm:$0xff]
                  %663 = vst [vmem:[%s661] sm:$0xff] %v662
                  %v664 = vld [vmem:[%s660 + $0x8] sm:$0xff]
                  %665 = vst [vmem:[%s661 + $0x8] sm:$0xff] %v664
                  %v666 = vld [vmem:[%s660 + $0x10] sm:$0xff]
                  %667 = vst [vmem:[%s661 + $0x10] sm:$0xff] %v666
                  %v668 = vld [vmem:[%s660 + $0x18] sm:$0xff]
                  %669 = vst [vmem:[%s661 + $0x18] sm:$0xff] %v668
                  %v670 = vld [vmem:[%s660 + $0x20] sm:$0xff]
                  %671 = vst [vmem:[%s661 + $0x20] sm:$0xff] %v670
                  %v672 = vld [vmem:[%s660 + $0x28] sm:$0xff]
                  %673 = vst [vmem:[%s661 + $0x28] sm:$0xff] %v672
                  %v674 = vld [vmem:[%s660 + $0x30] sm:$0xff]
                  %675 = vst [vmem:[%s661 + $0x30] sm:$0xff] %v674
                  %v676 = vld [vmem:[%s660 + $0x38] sm:$0xff]
                  %677 = vst [vmem:[%s661 + $0x38] sm:$0xff] %v676
                  %v678 = vld [vmem:[%s660 + $0x40] sm:$0xff]
                  %679 = vst [vmem:[%s661 + $0x40] sm:$0xff] %v678
                  %v680 = vld [vmem:[%s660 + $0x48] sm:$0xff]
                  %681 = vst [vmem:[%s661 + $0x48] sm:$0xff] %v680
                  %v682 = vld [vmem:[%s660 + $0x50] sm:$0xff]
                  %683 = vst [vmem:[%s661 + $0x50] sm:$0xff] %v682
                  %v684 = vld [vmem:[%s660 + $0x58] sm:$0xff]
                  %685 = vst [vmem:[%s661 + $0x58] sm:$0xff] %v684
                  %v686 = vld [vmem:[%s660 + $0x60] sm:$0xff]
                  %687 = vst [vmem:[%s661 + $0x60] sm:$0xff] %v686
                  %v688 = vld [vmem:[%s660 + $0x68] sm:$0xff]
                  %689 = vst [vmem:[%s661 + $0x68] sm:$0xff] %v688
                  %v690 = vld [vmem:[%s660 + $0x70] sm:$0xff]
                  %691 = vst [vmem:[%s661 + $0x70] sm:$0xff] %v690
                  %v692 = vld [vmem:[%s660 + $0x78] sm:$0xff]
                  %693 = vst [vmem:[%s661 + $0x78] sm:$0xff] %v692
                  %v694 = vld [vmem:[%s660 + $0x400] sm:$0xff]
                  %695 = vst [vmem:[%s661 + $0x80] sm:$0xff] %v694
                  %v696 = vld [vmem:[%s660 + $0x408] sm:$0xff]
                  %697 = vst [vmem:[%s661 + $0x88] sm:$0xff] %v696
                  %v698 = vld [vmem:[%s660 + $0x410] sm:$0xff]
                  %699 = vst [vmem:[%s661 + $0x90] sm:$0xff] %v698
                  %v700 = vld [vmem:[%s660 + $0x418] sm:$0xff]
                  %701 = vst [vmem:[%s661 + $0x98] sm:$0xff] %v700
                  %v702 = vld [vmem:[%s660 + $0x420] sm:$0xff]
                  %703 = vst [vmem:[%s661 + $0xa0] sm:$0xff] %v702
                  %v704 = vld [vmem:[%s660 + $0x428] sm:$0xff]
                  %705 = vst [vmem:[%s661 + $0xa8] sm:$0xff] %v704
                  %v706 = vld [vmem:[%s660 + $0x430] sm:$0xff]
                  %707 = vst [vmem:[%s661 + $0xb0] sm:$0xff] %v706
                  %v708 = vld [vmem:[%s660 + $0x438] sm:$0xff]
                  %709 = vst [vmem:[%s661 + $0xb8] sm:$0xff] %v708
                  %v710 = vld [vmem:[%s660 + $0x440] sm:$0xff]
                  %711 = vst [vmem:[%s661 + $0xc0] sm:$0xff] %v710
                  %v712 = vld [vmem:[%s660 + $0x448] sm:$0xff]
                  %713 = vst [vmem:[%s661 + $0xc8] sm:$0xff] %v712
                  %v714 = vld [vmem:[%s660 + $0x450] sm:$0xff]
                  %715 = vst [vmem:[%s661 + $0xd0] sm:$0xff] %v714
                  %v716 = vld [vmem:[%s660 + $0x458] sm:$0xff]
                  %717 = vst [vmem:[%s661 + $0xd8] sm:$0xff] %v716
                  %v718 = vld [vmem:[%s660 + $0x460] sm:$0xff]
                  %719 = vst [vmem:[%s661 + $0xe0] sm:$0xff] %v718
                  %v720 = vld [vmem:[%s660 + $0x468] sm:$0xff]
                  %721 = vst [vmem:[%s661 + $0xe8] sm:$0xff] %v720
                  %v722 = vld [vmem:[%s660 + $0x470] sm:$0xff]
                  %723 = vst [vmem:[%s661 + $0xf0] sm:$0xff] %v722
                  %v724 = vld [vmem:[%s660 + $0x478] sm:$0xff]
                  %725 = vst [vmem:[%s661 + $0xf8] sm:$0xff] %v724
                $region124: #{tpu_custom_call.1} parent=118 // loop_footer
                  %s659 = sadd.s32 1, %s655
                $region125: #{tpu_custom_call.1} parent=118 // loop_footer_branch
                  %654 = sbr.rel target = $region121
                $region126: #{tpu_custom_call.1} parent=118 // loop_exit
                  _
              $region119: #{tpu_custom_call.1} parent=103 // pred_fallthru
                _
              // Predicated region
              $region127: #{tpu_custom_call.1} parent=103 // pred_check
                _
              $region128: #{tpu_custom_call.1} parent=103 // pred_check_branch
                %727 = sbr.rel target = $region130
              $region129: #{tpu_custom_call.1} parent=103 // pred_region
                _
              $region130: #{tpu_custom_call.1} parent=103 // pred_fallthru
                _
            $region104: #{tpu_custom_call.1} parent=99 // pred_fallthru
              _
            // Predicated region
            $region105: #{tpu_custom_call.1} parent=99 // pred_check
              _
            $region106: #{tpu_custom_call.1} parent=99 // pred_check_branch
              %578 = sbr.rel target = $region108
            $region107: #{tpu_custom_call.1} parent=99 // pred_region
              loop: start=0, step=1, limit=1
              $region109: #{tpu_custom_call.1} parent=107 // loop_pre_header
                _
              $region110: #{tpu_custom_call.1} parent=107 // loop_header
                %s581 = sphi 0, %s585
                %p582 = scmp.ge.s32.totalorder %s581, 1
                %s586 = sphi %s572, %s572
                %s587 = sphi %s567, %s567
              $region111: #{tpu_custom_call.1} parent=107 // loop_header_branch
                %584 = sbr.rel (%p582) target = $region115
              $region112: #{tpu_custom_call.1} parent=107 // loop_body
                %v588 = vld [vmem:[%s586] sm:$0xff]
                %589 = vst [vmem:[%s587] sm:$0xff] %v588
                %v590 = vld [vmem:[%s586 + $0x8] sm:$0xff]
                %591 = vst [vmem:[%s587 + $0x8] sm:$0xff] %v590
                %v592 = vld [vmem:[%s586 + $0x10] sm:$0xff]
                %593 = vst [vmem:[%s587 + $0x10] sm:$0xff] %v592
                %v594 = vld [vmem:[%s586 + $0x18] sm:$0xff]
                %595 = vst [vmem:[%s587 + $0x18] sm:$0xff] %v594
                %v596 = vld [vmem:[%s586 + $0x20] sm:$0xff]
                %597 = vst [vmem:[%s587 + $0x20] sm:$0xff] %v596
                %v598 = vld [vmem:[%s586 + $0x28] sm:$0xff]
                %599 = vst [vmem:[%s587 + $0x28] sm:$0xff] %v598
                %v600 = vld [vmem:[%s586 + $0x30] sm:$0xff]
                %601 = vst [vmem:[%s587 + $0x30] sm:$0xff] %v600
                %v602 = vld [vmem:[%s586 + $0x38] sm:$0xff]
                %603 = vst [vmem:[%s587 + $0x38] sm:$0xff] %v602
                %v604 = vld [vmem:[%s586 + $0x40] sm:$0xff]
                %605 = vst [vmem:[%s587 + $0x40] sm:$0xff] %v604
                %v606 = vld [vmem:[%s586 + $0x48] sm:$0xff]
                %607 = vst [vmem:[%s587 + $0x48] sm:$0xff] %v606
                %v608 = vld [vmem:[%s586 + $0x50] sm:$0xff]
                %609 = vst [vmem:[%s587 + $0x50] sm:$0xff] %v608
                %v610 = vld [vmem:[%s586 + $0x58] sm:$0xff]
                %611 = vst [vmem:[%s587 + $0x58] sm:$0xff] %v610
                %v612 = vld [vmem:[%s586 + $0x60] sm:$0xff]
                %613 = vst [vmem:[%s587 + $0x60] sm:$0xff] %v612
                %v614 = vld [vmem:[%s586 + $0x68] sm:$0xff]
                %615 = vst [vmem:[%s587 + $0x68] sm:$0xff] %v614
                %v616 = vld [vmem:[%s586 + $0x70] sm:$0xff]
                %617 = vst [vmem:[%s587 + $0x70] sm:$0xff] %v616
                %v618 = vld [vmem:[%s586 + $0x78] sm:$0xff]
                %619 = vst [vmem:[%s587 + $0x78] sm:$0xff] %v618
                %v620 = vld [vmem:[%s586 + $0x400] sm:$0xff]
                %621 = vst [vmem:[%s587 + $0x80] sm:$0xff] %v620
                %v622 = vld [vmem:[%s586 + $0x408] sm:$0xff]
                %623 = vst [vmem:[%s587 + $0x88] sm:$0xff] %v622
                %v624 = vld [vmem:[%s586 + $0x410] sm:$0xff]
                %625 = vst [vmem:[%s587 + $0x90] sm:$0xff] %v624
                %v626 = vld [vmem:[%s586 + $0x418] sm:$0xff]
                %627 = vst [vmem:[%s587 + $0x98] sm:$0xff] %v626
                %v628 = vld [vmem:[%s586 + $0x420] sm:$0xff]
                %629 = vst [vmem:[%s587 + $0xa0] sm:$0xff] %v628
                %v630 = vld [vmem:[%s586 + $0x428] sm:$0xff]
                %631 = vst [vmem:[%s587 + $0xa8] sm:$0xff] %v630
                %v632 = vld [vmem:[%s586 + $0x430] sm:$0xff]
                %633 = vst [vmem:[%s587 + $0xb0] sm:$0xff] %v632
                %v634 = vld [vmem:[%s586 + $0x438] sm:$0xff]
                %635 = vst [vmem:[%s587 + $0xb8] sm:$0xff] %v634
                %v636 = vld [vmem:[%s586 + $0x440] sm:$0xff]
                %637 = vst [vmem:[%s587 + $0xc0] sm:$0xff] %v636
                %v638 = vld [vmem:[%s586 + $0x448] sm:$0xff]
                %639 = vst [vmem:[%s587 + $0xc8] sm:$0xff] %v638
                %v640 = vld [vmem:[%s586 + $0x450] sm:$0xff]
                %641 = vst [vmem:[%s587 + $0xd0] sm:$0xff] %v640
                %v642 = vld [vmem:[%s586 + $0x458] sm:$0xff]
                %643 = vst [vmem:[%s587 + $0xd8] sm:$0xff] %v642
                %v644 = vld [vmem:[%s586 + $0x460] sm:$0xff]
                %645 = vst [vmem:[%s587 + $0xe0] sm:$0xff] %v644
                %v646 = vld [vmem:[%s586 + $0x468] sm:$0xff]
                %647 = vst [vmem:[%s587 + $0xe8] sm:$0xff] %v646
                %v648 = vld [vmem:[%s586 + $0x470] sm:$0xff]
                %649 = vst [vmem:[%s587 + $0xf0] sm:$0xff] %v648
                %v650 = vld [vmem:[%s586 + $0x478] sm:$0xff]
                %651 = vst [vmem:[%s587 + $0xf8] sm:$0xff] %v650
              $region113: #{tpu_custom_call.1} parent=107 // loop_footer
                %s585 = sadd.s32 1, %s581
              $region114: #{tpu_custom_call.1} parent=107 // loop_footer_branch
                %580 = sbr.rel target = $region110
              $region115: #{tpu_custom_call.1} parent=107 // loop_exit
                _
            $region108: #{tpu_custom_call.1} parent=99 // pred_fallthru
              _
          $region100: #{tpu_custom_call.1} parent=95 // pred_fallthru
            _
          %728 = vnop
        $region96: #{tpu_custom_call.1} parent=15 // pred_fallthru
          _
        // Predicated region
        $region131: #{tpu_custom_call.1} parent=15 // pred_check
          %p729 = pneg %p142
        $region132: #{tpu_custom_call.1} parent=15 // pred_check_branch
          %731 = sbr.rel (%p729) target = $region134
        $region133: #{tpu_custom_call.1} parent=15 // pred_region
          %s732 = sand.u32 %s132, 1
          %s733 = sand.u32 %s132, 1
          %s734 = smul.addr %s733, 128
          %s735 = scalar_lea.vmem [#allocation5], %s734
          %s736 = smul.u32 16, %s23
          %s737 = smul.addr %s736, 2
          %s738 = sadd.s32 %s24, %s737
          %s739 = smul.addr %s22, 64
          %s740 = sadd.s32 %s738, %s739
          %s741 = smul.addr %s740, 8
          %s742 = scalar_lea.vmem %s3, %s741
          // Predicated region
          $region135: #{tpu_custom_call.1} parent=133 // pred_check
            _
          $region136: #{tpu_custom_call.1} parent=133 // pred_check_branch
            %744 = sbr.rel (0) target = $region138
          $region137: #{tpu_custom_call.1} parent=133 // pred_region
            // Predicated region
            $region139: #{tpu_custom_call.1} parent=137 // pred_check
              _
            $region140: #{tpu_custom_call.1} parent=137 // pred_check_branch
              %746 = sbr.rel (0) target = $region142
            $region141: #{tpu_custom_call.1} parent=137 // pred_region
              // Predicated region
              $region154: #{tpu_custom_call.1} parent=141 // pred_check
                _
              $region155: #{tpu_custom_call.1} parent=141 // pred_check_branch
                %791 = sbr.rel (0) target = $region157
              $region156: #{tpu_custom_call.1} parent=141 // pred_region
                loop: start=0, step=1, limit=1
                $region158: #{tpu_custom_call.1} parent=156 // loop_pre_header
                  _
                $region159: #{tpu_custom_call.1} parent=156 // loop_header
                  %s793 = sphi 0, %s797
                  %p794 = scmp.ge.s32.totalorder %s793, 1
                  %s798 = sphi %s742, %s742
                  %s799 = sphi %s735, %s735
                $region160: #{tpu_custom_call.1} parent=156 // loop_header_branch
                  %796 = sbr.rel (%p794) target = $region164
                $region161: #{tpu_custom_call.1} parent=156 // loop_body
                  %v800 = vld [vmem:[%s798] sm:$0xff]
                  %801 = vst [vmem:[%s799] sm:$0xff] %v800
                  %v802 = vld [vmem:[%s798 + $0x10] sm:$0xff]
                  %803 = vst [vmem:[%s799 + $0x8] sm:$0xff] %v802
                  %v804 = vld [vmem:[%s798 + $0x20] sm:$0xff]
                  %805 = vst [vmem:[%s799 + $0x10] sm:$0xff] %v804
                  %v806 = vld [vmem:[%s798 + $0x30] sm:$0xff]
                  %807 = vst [vmem:[%s799 + $0x18] sm:$0xff] %v806
                  %v808 = vld [vmem:[%s798 + $0x40] sm:$0xff]
                  %809 = vst [vmem:[%s799 + $0x20] sm:$0xff] %v808
                  %v810 = vld [vmem:[%s798 + $0x50] sm:$0xff]
                  %811 = vst [vmem:[%s799 + $0x28] sm:$0xff] %v810
                  %v812 = vld [vmem:[%s798 + $0x60] sm:$0xff]
                  %813 = vst [vmem:[%s799 + $0x30] sm:$0xff] %v812
                  %v814 = vld [vmem:[%s798 + $0x70] sm:$0xff]
                  %815 = vst [vmem:[%s799 + $0x38] sm:$0xff] %v814
                  %v816 = vld [vmem:[%s798 + $0x80] sm:$0xff]
                  %817 = vst [vmem:[%s799 + $0x40] sm:$0xff] %v816
                  %v818 = vld [vmem:[%s798 + $0x90] sm:$0xff]
                  %819 = vst [vmem:[%s799 + $0x48] sm:$0xff] %v818
                  %v820 = vld [vmem:[%s798 + $0xa0] sm:$0xff]
                  %821 = vst [vmem:[%s799 + $0x50] sm:$0xff] %v820
                  %v822 = vld [vmem:[%s798 + $0xb0] sm:$0xff]
                  %823 = vst [vmem:[%s799 + $0x58] sm:$0xff] %v822
                  %v824 = vld [vmem:[%s798 + $0xc0] sm:$0xff]
                  %825 = vst [vmem:[%s799 + $0x60] sm:$0xff] %v824
                  %v826 = vld [vmem:[%s798 + $0xd0] sm:$0xff]
                  %827 = vst [vmem:[%s799 + $0x68] sm:$0xff] %v826
                  %v828 = vld [vmem:[%s798 + $0xe0] sm:$0xff]
                  %829 = vst [vmem:[%s799 + $0x70] sm:$0xff] %v828
                  %v830 = vld [vmem:[%s798 + $0xf0] sm:$0xff]
                  %831 = vst [vmem:[%s799 + $0x78] sm:$0xff] %v830
                $region162: #{tpu_custom_call.1} parent=156 // loop_footer
                  %s797 = sadd.s32 1, %s793
                $region163: #{tpu_custom_call.1} parent=156 // loop_footer_branch
                  %792 = sbr.rel target = $region159
                $region164: #{tpu_custom_call.1} parent=156 // loop_exit
                  _
              $region157: #{tpu_custom_call.1} parent=141 // pred_fallthru
                _
              // Predicated region
              $region165: #{tpu_custom_call.1} parent=141 // pred_check
                _
              $region166: #{tpu_custom_call.1} parent=141 // pred_check_branch
                %833 = sbr.rel target = $region168
              $region167: #{tpu_custom_call.1} parent=141 // pred_region
                _
              $region168: #{tpu_custom_call.1} parent=141 // pred_fallthru
                _
            $region142: #{tpu_custom_call.1} parent=137 // pred_fallthru
              _
            // Predicated region
            $region143: #{tpu_custom_call.1} parent=137 // pred_check
              _
            $region144: #{tpu_custom_call.1} parent=137 // pred_check_branch
              %748 = sbr.rel target = $region146
            $region145: #{tpu_custom_call.1} parent=137 // pred_region
              loop: start=0, step=1, limit=1
              $region147: #{tpu_custom_call.1} parent=145 // loop_pre_header
                _
              $region148: #{tpu_custom_call.1} parent=145 // loop_header
                %s751 = sphi 0, %s755
                %p752 = scmp.ge.s32.totalorder %s751, 1
                %s756 = sphi %s742, %s742
                %s757 = sphi %s735, %s735
              $region149: #{tpu_custom_call.1} parent=145 // loop_header_branch
                %754 = sbr.rel (%p752) target = $region153
              $region150: #{tpu_custom_call.1} parent=145 // loop_body
                %v758 = vld [vmem:[%s756] sm:$0xff]
                %759 = vst [vmem:[%s757] sm:$0xff] %v758
                %v760 = vld [vmem:[%s756 + $0x10] sm:$0xff]
                %761 = vst [vmem:[%s757 + $0x8] sm:$0xff] %v760
                %v762 = vld [vmem:[%s756 + $0x20] sm:$0xff]
                %763 = vst [vmem:[%s757 + $0x10] sm:$0xff] %v762
                %v764 = vld [vmem:[%s756 + $0x30] sm:$0xff]
                %765 = vst [vmem:[%s757 + $0x18] sm:$0xff] %v764
                %v766 = vld [vmem:[%s756 + $0x40] sm:$0xff]
                %767 = vst [vmem:[%s757 + $0x20] sm:$0xff] %v766
                %v768 = vld [vmem:[%s756 + $0x50] sm:$0xff]
                %769 = vst [vmem:[%s757 + $0x28] sm:$0xff] %v768
                %v770 = vld [vmem:[%s756 + $0x60] sm:$0xff]
                %771 = vst [vmem:[%s757 + $0x30] sm:$0xff] %v770
                %v772 = vld [vmem:[%s756 + $0x70] sm:$0xff]
                %773 = vst [vmem:[%s757 + $0x38] sm:$0xff] %v772
                %v774 = vld [vmem:[%s756 + $0x80] sm:$0xff]
                %775 = vst [vmem:[%s757 + $0x40] sm:$0xff] %v774
                %v776 = vld [vmem:[%s756 + $0x90] sm:$0xff]
                %777 = vst [vmem:[%s757 + $0x48] sm:$0xff] %v776
                %v778 = vld [vmem:[%s756 + $0xa0] sm:$0xff]
                %779 = vst [vmem:[%s757 + $0x50] sm:$0xff] %v778
                %v780 = vld [vmem:[%s756 + $0xb0] sm:$0xff]
                %781 = vst [vmem:[%s757 + $0x58] sm:$0xff] %v780
                %v782 = vld [vmem:[%s756 + $0xc0] sm:$0xff]
                %783 = vst [vmem:[%s757 + $0x60] sm:$0xff] %v782
                %v784 = vld [vmem:[%s756 + $0xd0] sm:$0xff]
                %785 = vst [vmem:[%s757 + $0x68] sm:$0xff] %v784
                %v786 = vld [vmem:[%s756 + $0xe0] sm:$0xff]
                %787 = vst [vmem:[%s757 + $0x70] sm:$0xff] %v786
                %v788 = vld [vmem:[%s756 + $0xf0] sm:$0xff]
                %789 = vst [vmem:[%s757 + $0x78] sm:$0xff] %v788
              $region151: #{tpu_custom_call.1} parent=145 // loop_footer
                %s755 = sadd.s32 1, %s751
              $region152: #{tpu_custom_call.1} parent=145 // loop_footer_branch
                %750 = sbr.rel target = $region148
              $region153: #{tpu_custom_call.1} parent=145 // loop_exit
                _
            $region146: #{tpu_custom_call.1} parent=137 // pred_fallthru
              _
          $region138: #{tpu_custom_call.1} parent=133 // pred_fallthru
            _
          %834 = vnop
        $region134: #{tpu_custom_call.1} parent=15 // pred_fallthru
          _
      $region16: #{tpu_custom_call.1} parent=5 // pred_fallthru
        _
      %p835 = scmp.le.s32.totalorder 1, %s15
      %p836 = scmp.lt.s32.totalorder %s15, 17
      %p837 = pnand %p835, %p836
      %p838 = pneg %p837
      // Predicated region
      $region169: #{tpu_custom_call.1} parent=5 // pred_check
        _
      $region170: #{tpu_custom_call.1} parent=5 // pred_check_branch
        %840 = sbr.rel (%p837) target = $region172
      $region171: #{tpu_custom_call.1} parent=5 // pred_region
        %s841 = ssub.s32 %s15, 1
        %s842 = sand.u32 %s49, 1
        %s843 = sand.u32 %s49, 1
        %s844 = smul.addr %s843, 256
        %s845 = scalar_lea.vmem [#allocation2], %s844
        // Predicated region
        $region173: #{tpu_custom_call.1} parent=171 // pred_check
          %p846 = pneg %p62
        $region174: #{tpu_custom_call.1} parent=171 // pred_check_branch
          %848 = sbr.rel (%p846) target = $region176
        $region175: #{tpu_custom_call.1} parent=171 // pred_region
          _
        $region176: #{tpu_custom_call.1} parent=171 // pred_fallthru
          _
        %s849 = sand.u32 %s77, 1
        %s850 = sand.u32 %s77, 1
        %s851 = smul.addr %s850, 256
        %s852 = scalar_lea.vmem [#allocation3], %s851
        // Predicated region
        $region177: #{tpu_custom_call.1} parent=171 // pred_check
          %p853 = pneg %p90
        $region178: #{tpu_custom_call.1} parent=171 // pred_check_branch
          %855 = sbr.rel (%p853) target = $region180
        $region179: #{tpu_custom_call.1} parent=171 // pred_region
          _
        $region180: #{tpu_custom_call.1} parent=171 // pred_fallthru
          _
        %s856 = sand.u32 %s105, 1
        %s857 = sand.u32 %s105, 1
        %s858 = smul.addr %s857, 256
        %s859 = scalar_lea.vmem [#allocation4], %s858
        // Predicated region
        $region181: #{tpu_custom_call.1} parent=171 // pred_check
          %p860 = pneg %p118
        $region182: #{tpu_custom_call.1} parent=171 // pred_check_branch
          %862 = sbr.rel (%p860) target = $region184
        $region183: #{tpu_custom_call.1} parent=171 // pred_region
          _
        $region184: #{tpu_custom_call.1} parent=171 // pred_fallthru
          _
        %s863 = sand.u32 %s135, 1
        %s864 = sand.u32 %s135, 1
        %s865 = smul.addr %s864, 128
        %s866 = scalar_lea.vmem [#allocation5], %s865
        // Predicated region
        $region185: #{tpu_custom_call.1} parent=171 // pred_check
          %p867 = pneg %p148
        $region186: #{tpu_custom_call.1} parent=171 // pred_check_branch
          %869 = sbr.rel (%p867) target = $region188
        $region187: #{tpu_custom_call.1} parent=171 // pred_region
          _
        $region188: #{tpu_custom_call.1} parent=171 // pred_fallthru
          _
        %s870 = sand.u32 %s49, 1
        %s871 = sand.u32 %s49, 1
        %s872 = smul.addr %s871, 256
        %s873 = scalar_lea.vmem [#allocation2], %s872
        %p874 = pneg %p62
        %p875 = pneg %p59
        %s876 = sand.u32 %s77, 1
        %s877 = sand.u32 %s77, 1
        %s878 = smul.addr %s877, 256
        %s879 = scalar_lea.vmem [#allocation3], %s878
        %p880 = pneg %p90
        %p881 = pneg %p87
        %s882 = sand.u32 %s105, 1
        %s883 = sand.u32 %s105, 1
        %s884 = smul.addr %s883, 256
        %s885 = scalar_lea.vmem [#allocation4], %s884
        %p886 = pneg %p118
        %p887 = pneg %p115
        %s888 = sand.u32 %s135, 1
        %s889 = sand.u32 %s135, 1
        %s890 = smul.addr %s889, 128
        %s891 = scalar_lea.vmem [#allocation5], %s890
        %p892 = pneg %p148
        %p893 = pneg %p145
        %p894 = pneg %p176
        %p895 = pneg %p173
        %s896 = sand.u32 %s163, 1
        %s897 = sand.u32 %s163, 1
        %s898 = smul.addr %s897, 256
        %s899 = scalar_lea.vmem [#allocation6], %s898
        %p900 = pneg %p206
        %p901 = pneg %p203
        %s902 = sand.u32 %s193, 1
        %s903 = scalar_lea.sflag [#allocation8], %s902
        %s904 = sand.u32 %s193, 1
        %s905 = smul.addr %s904, 256
        %s906 = scalar_lea.vmem [#allocation7], %s905
        %s907 = smul.u32 16, %s26
        %s908 = smul.u32 16, %s27
        %s909 = smul.u32 16, %s27
        %s910 = smul.u32 16, %s26
        %s911 = smul.u32 16, %s26
        %s912 = smul.u32 16, %s26
        %p913 = scmp.eq.s32.totalorder %s27, 0
        // Predicated region
        $region189: #{tpu_custom_call.1} parent=171 // pred_check
          %p914 = pneg %p913
        $region190: #{tpu_custom_call.1} parent=171 // pred_check_branch
          %916 = sbr.rel (%p914) target = $region192
        $region191: #{tpu_custom_call.1} parent=171 // pred_region
          %vm917 = vcmask 261120
          %918 = vst.msk [vmem:[%s899] sm:$0xff] %vm917, 0.0
          %919 = vst.msk [vmem:[%s899 + $0x8] sm:$0xff] %vm917, 0.0
          %920 = vst.msk [vmem:[%s899 + $0x10] sm:$0xff] %vm917, 0.0
          %921 = vst.msk [vmem:[%s899 + $0x18] sm:$0xff] %vm917, 0.0
          %922 = vst.msk [vmem:[%s899 + $0x20] sm:$0xff] %vm917, 0.0
          %923 = vst.msk [vmem:[%s899 + $0x28] sm:$0xff] %vm917, 0.0
          %924 = vst.msk [vmem:[%s899 + $0x30] sm:$0xff] %vm917, 0.0
          %925 = vst.msk [vmem:[%s899 + $0x38] sm:$0xff] %vm917, 0.0
          %926 = vst.msk [vmem:[%s899 + $0x40] sm:$0xff] %vm917, 0.0
          %927 = vst.msk [vmem:[%s899 + $0x48] sm:$0xff] %vm917, 0.0
          %928 = vst.msk [vmem:[%s899 + $0x50] sm:$0xff] %vm917, 0.0
          %929 = vst.msk [vmem:[%s899 + $0x58] sm:$0xff] %vm917, 0.0
          %930 = vst.msk [vmem:[%s899 + $0x60] sm:$0xff] %vm917, 0.0
          %931 = vst.msk [vmem:[%s899 + $0x68] sm:$0xff] %vm917, 0.0
          %932 = vst.msk [vmem:[%s899 + $0x70] sm:$0xff] %vm917, 0.0
          %933 = vst.msk [vmem:[%s899 + $0x78] sm:$0xff] %vm917, 0.0
          %934 = vst.msk [vmem:[%s899 + $0x80] sm:$0xff] %vm917, 0.0
          %935 = vst.msk [vmem:[%s899 + $0x88] sm:$0xff] %vm917, 0.0
          %936 = vst.msk [vmem:[%s899 + $0x90] sm:$0xff] %vm917, 0.0
          %937 = vst.msk [vmem:[%s899 + $0x98] sm:$0xff] %vm917, 0.0
          %938 = vst.msk [vmem:[%s899 + $0xa0] sm:$0xff] %vm917, 0.0
          %939 = vst.msk [vmem:[%s899 + $0xa8] sm:$0xff] %vm917, 0.0
          %940 = vst.msk [vmem:[%s899 + $0xb0] sm:$0xff] %vm917, 0.0
          %941 = vst.msk [vmem:[%s899 + $0xb8] sm:$0xff] %vm917, 0.0
          %942 = vst.msk [vmem:[%s899 + $0xc0] sm:$0xff] %vm917, 0.0
          %943 = vst.msk [vmem:[%s899 + $0xc8] sm:$0xff] %vm917, 0.0
          %944 = vst.msk [vmem:[%s899 + $0xd0] sm:$0xff] %vm917, 0.0
          %945 = vst.msk [vmem:[%s899 + $0xd8] sm:$0xff] %vm917, 0.0
          %946 = vst.msk [vmem:[%s899 + $0xe0] sm:$0xff] %vm917, 0.0
          %947 = vst.msk [vmem:[%s899 + $0xe8] sm:$0xff] %vm917, 0.0
          %948 = vst.msk [vmem:[%s899 + $0xf0] sm:$0xff] %vm917, 0.0
          %949 = vst.msk [vmem:[%s899 + $0xf8] sm:$0xff] %vm917, 0.0
        $region192: #{tpu_custom_call.1} parent=171 // pred_fallthru
          _
        %v950 = vld [vmem:[%s845] sm:$0xff]
        %v951 = vld [vmem:[%s845 + $0x8] sm:$0xff]
        %v952 = vld [vmem:[%s845 + $0x10] sm:$0xff]
        %v953 = vld [vmem:[%s845 + $0x18] sm:$0xff]
        %v954 = vld [vmem:[%s845 + $0x20] sm:$0xff]
        %v955 = vld [vmem:[%s845 + $0x28] sm:$0xff]
        %v956 = vld [vmem:[%s845 + $0x30] sm:$0xff]
        %v957 = vld [vmem:[%s845 + $0x38] sm:$0xff]
        %v958 = vld [vmem:[%s845 + $0x40] sm:$0xff]
        %v959 = vld [vmem:[%s845 + $0x48] sm:$0xff]
        %v960 = vld [vmem:[%s845 + $0x50] sm:$0xff]
        %v961 = vld [vmem:[%s845 + $0x58] sm:$0xff]
        %v962 = vld [vmem:[%s845 + $0x60] sm:$0xff]
        %v963 = vld [vmem:[%s845 + $0x68] sm:$0xff]
        %v964 = vld [vmem:[%s845 + $0x70] sm:$0xff]
        %v965 = vld [vmem:[%s845 + $0x78] sm:$0xff]
        %v966 = vld [vmem:[%s845 + $0x80] sm:$0xff]
        %v967 = vld [vmem:[%s845 + $0x88] sm:$0xff]
        %v968 = vld [vmem:[%s845 + $0x90] sm:$0xff]
        %v969 = vld [vmem:[%s845 + $0x98] sm:$0xff]
        %v970 = vld [vmem:[%s845 + $0xa0] sm:$0xff]
        %v971 = vld [vmem:[%s845 + $0xa8] sm:$0xff]
        %v972 = vld [vmem:[%s845 + $0xb0] sm:$0xff]
        %v973 = vld [vmem:[%s845 + $0xb8] sm:$0xff]
        %v974 = vld [vmem:[%s845 + $0xc0] sm:$0xff]
        %v975 = vld [vmem:[%s845 + $0xc8] sm:$0xff]
        %v976 = vld [vmem:[%s845 + $0xd0] sm:$0xff]
        %v977 = vld [vmem:[%s845 + $0xd8] sm:$0xff]
        %v978 = vld [vmem:[%s845 + $0xe0] sm:$0xff]
        %v979 = vld [vmem:[%s845 + $0xe8] sm:$0xff]
        %v980 = vld [vmem:[%s845 + $0xf0] sm:$0xff]
        %v981 = vld [vmem:[%s845 + $0xf8] sm:$0xff]
        %v982 = vmul.f32 %v950, 0.17677669
        %v983 = vmul.f32 %v951, 0.17677669
        %v984 = vmul.f32 %v952, 0.17677669
        %v985 = vmul.f32 %v953, 0.17677669
        %v986 = vmul.f32 %v954, 0.17677669
        %v987 = vmul.f32 %v955, 0.17677669
        %v988 = vmul.f32 %v956, 0.17677669
        %v989 = vmul.f32 %v957, 0.17677669
        %v990 = vmul.f32 %v958, 0.17677669
        %v991 = vmul.f32 %v959, 0.17677669
        %v992 = vmul.f32 %v960, 0.17677669
        %v993 = vmul.f32 %v961, 0.17677669
        %v994 = vmul.f32 %v962, 0.17677669
        %v995 = vmul.f32 %v963, 0.17677669
        %v996 = vmul.f32 %v964, 0.17677669
        %v997 = vmul.f32 %v965, 0.17677669
        %v998 = vmul.f32 %v966, 0.17677669
        %v999 = vmul.f32 %v967, 0.17677669
        %v1000 = vmul.f32 %v968, 0.17677669
        %v1001 = vmul.f32 %v969, 0.17677669
        %v1002 = vmul.f32 %v970, 0.17677669
        %v1003 = vmul.f32 %v971, 0.17677669
        %v1004 = vmul.f32 %v972, 0.17677669
        %v1005 = vmul.f32 %v973, 0.17677669
        %v1006 = vmul.f32 %v974, 0.17677669
        %v1007 = vmul.f32 %v975, 0.17677669
        %v1008 = vmul.f32 %v976, 0.17677669
        %v1009 = vmul.f32 %v977, 0.17677669
        %v1010 = vmul.f32 %v978, 0.17677669
        %v1011 = vmul.f32 %v979, 0.17677669
        %v1012 = vmul.f32 %v980, 0.17677669
        %v1013 = vmul.f32 %v981, 0.17677669
        %v1014 = vld [vmem:[%s852] sm:$0xff]
        %v1015 = vld [vmem:[%s852 + $0x8] sm:$0xff]
        %v1016 = vld [vmem:[%s852 + $0x10] sm:$0xff]
        %v1017 = vld [vmem:[%s852 + $0x18] sm:$0xff]
        %v1018 = vld [vmem:[%s852 + $0x20] sm:$0xff]
        %v1019 = vld [vmem:[%s852 + $0x28] sm:$0xff]
        %v1020 = vld [vmem:[%s852 + $0x30] sm:$0xff]
        %v1021 = vld [vmem:[%s852 + $0x38] sm:$0xff]
        %v1022 = vld [vmem:[%s852 + $0x40] sm:$0xff]
        %v1023 = vld [vmem:[%s852 + $0x48] sm:$0xff]
        %v1024 = vld [vmem:[%s852 + $0x50] sm:$0xff]
        %v1025 = vld [vmem:[%s852 + $0x58] sm:$0xff]
        %v1026 = vld [vmem:[%s852 + $0x60] sm:$0xff]
        %v1027 = vld [vmem:[%s852 + $0x68] sm:$0xff]
        %v1028 = vld [vmem:[%s852 + $0x70] sm:$0xff]
        %v1029 = vld [vmem:[%s852 + $0x78] sm:$0xff]
        %v1030 = vld [vmem:[%s852 + $0x80] sm:$0xff]
        %v1031 = vld [vmem:[%s852 + $0x88] sm:$0xff]
        %v1032 = vld [vmem:[%s852 + $0x90] sm:$0xff]
        %v1033 = vld [vmem:[%s852 + $0x98] sm:$0xff]
        %v1034 = vld [vmem:[%s852 + $0xa0] sm:$0xff]
        %v1035 = vld [vmem:[%s852 + $0xa8] sm:$0xff]
        %v1036 = vld [vmem:[%s852 + $0xb0] sm:$0xff]
        %v1037 = vld [vmem:[%s852 + $0xb8] sm:$0xff]
        %v1038 = vld [vmem:[%s852 + $0xc0] sm:$0xff]
        %v1039 = vld [vmem:[%s852 + $0xc8] sm:$0xff]
        %v1040 = vld [vmem:[%s852 + $0xd0] sm:$0xff]
        %v1041 = vld [vmem:[%s852 + $0xd8] sm:$0xff]
        %v1042 = vld [vmem:[%s852 + $0xe0] sm:$0xff]
        %v1043 = vld [vmem:[%s852 + $0xe8] sm:$0xff]
        %v1044 = vld [vmem:[%s852 + $0xf0] sm:$0xff]
        %v1045 = vld [vmem:[%s852 + $0xf8] sm:$0xff]
        %v1046 = vld [vmem:[%s859] sm:$0xff]
        %v1047 = vld [vmem:[%s859 + $0x8] sm:$0xff]
        %v1048 = vld [vmem:[%s859 + $0x10] sm:$0xff]
        %v1049 = vld [vmem:[%s859 + $0x18] sm:$0xff]
        %v1050 = vld [vmem:[%s859 + $0x20] sm:$0xff]
        %v1051 = vld [vmem:[%s859 + $0x28] sm:$0xff]
        %v1052 = vld [vmem:[%s859 + $0x30] sm:$0xff]
        %v1053 = vld [vmem:[%s859 + $0x38] sm:$0xff]
        %v1054 = vld [vmem:[%s859 + $0x40] sm:$0xff]
        %v1055 = vld [vmem:[%s859 + $0x48] sm:$0xff]
        %v1056 = vld [vmem:[%s859 + $0x50] sm:$0xff]
        %v1057 = vld [vmem:[%s859 + $0x58] sm:$0xff]
        %v1058 = vld [vmem:[%s859 + $0x60] sm:$0xff]
        %v1059 = vld [vmem:[%s859 + $0x68] sm:$0xff]
        %v1060 = vld [vmem:[%s859 + $0x70] sm:$0xff]
        %v1061 = vld [vmem:[%s859 + $0x78] sm:$0xff]
        %v1062 = vld [vmem:[%s859 + $0x80] sm:$0xff]
        %v1063 = vld [vmem:[%s859 + $0x88] sm:$0xff]
        %v1064 = vld [vmem:[%s859 + $0x90] sm:$0xff]
        %v1065 = vld [vmem:[%s859 + $0x98] sm:$0xff]
        %v1066 = vld [vmem:[%s859 + $0xa0] sm:$0xff]
        %v1067 = vld [vmem:[%s859 + $0xa8] sm:$0xff]
        %v1068 = vld [vmem:[%s859 + $0xb0] sm:$0xff]
        %v1069 = vld [vmem:[%s859 + $0xb8] sm:$0xff]
        %v1070 = vld [vmem:[%s859 + $0xc0] sm:$0xff]
        %v1071 = vld [vmem:[%s859 + $0xc8] sm:$0xff]
        %v1072 = vld [vmem:[%s859 + $0xd0] sm:$0xff]
        %v1073 = vld [vmem:[%s859 + $0xd8] sm:$0xff]
        %v1074 = vld [vmem:[%s859 + $0xe0] sm:$0xff]
        %v1075 = vld [vmem:[%s859 + $0xe8] sm:$0xff]
        %v1076 = vld [vmem:[%s859 + $0xf0] sm:$0xff]
        %v1077 = vld [vmem:[%s859 + $0xf8] sm:$0xff]
        %v1078 = vld [vmem:[%s866] sm:$0xff]
        %v1079 = vld [vmem:[%s866 + $0x8] sm:$0xff]
        %v1080 = vld [vmem:[%s866 + $0x10] sm:$0xff]
        %v1081 = vld [vmem:[%s866 + $0x18] sm:$0xff]
        %v1082 = vld [vmem:[%s866 + $0x20] sm:$0xff]
        %v1083 = vld [vmem:[%s866 + $0x28] sm:$0xff]
        %v1084 = vld [vmem:[%s866 + $0x30] sm:$0xff]
        %v1085 = vld [vmem:[%s866 + $0x38] sm:$0xff]
        %v1086 = vld [vmem:[%s866 + $0x40] sm:$0xff]
        %v1087 = vld [vmem:[%s866 + $0x48] sm:$0xff]
        %v1088 = vld [vmem:[%s866 + $0x50] sm:$0xff]
        %v1089 = vld [vmem:[%s866 + $0x58] sm:$0xff]
        %v1090 = vld [vmem:[%s866 + $0x60] sm:$0xff]
        %v1091 = vld [vmem:[%s866 + $0x68] sm:$0xff]
        %v1092 = vld [vmem:[%s866 + $0x70] sm:$0xff]
        %v1093 = vld [vmem:[%s866 + $0x78] sm:$0xff]
        %vm1094 = vcmask 261120
        %v1096 = vsel %vm1094, %v982, 0
        %v1099 = vsel %vm1094, %v983, 0
        %v1102 = vsel %vm1094, %v984, 0
        %v1105 = vsel %vm1094, %v985, 0
        %v1108 = vsel %vm1094, %v986, 0
        %v1111 = vsel %vm1094, %v987, 0
        %v1114 = vsel %vm1094, %v988, 0
        %v1117 = vsel %vm1094, %v989, 0
        %v1120 = vsel %vm1094, %v990, 0
        %v1123 = vsel %vm1094, %v991, 0
        %v1126 = vsel %vm1094, %v992, 0
        %v1129 = vsel %vm1094, %v993, 0
        %v1132 = vsel %vm1094, %v994, 0
        %v1135 = vsel %vm1094, %v995, 0
        %v1138 = vsel %vm1094, %v996, 0
        %v1141 = vsel %vm1094, %v997, 0
        %v1144 = vsel %vm1094, %v1014, 0
        %v1147 = vsel %vm1094, %v1015, 0
        %v1150 = vsel %vm1094, %v1016, 0
        %v1153 = vsel %vm1094, %v1017, 0
        %v1156 = vsel %vm1094, %v1018, 0
        %v1159 = vsel %vm1094, %v1019, 0
        %v1162 = vsel %vm1094, %v1020, 0
        %v1165 = vsel %vm1094, %v1021, 0
        %v1168 = vsel %vm1094, %v1022, 0
        %v1171 = vsel %vm1094, %v1023, 0
        %v1174 = vsel %vm1094, %v1024, 0
        %v1177 = vsel %vm1094, %v1025, 0
        %v1180 = vsel %vm1094, %v1026, 0
        %v1183 = vsel %vm1094, %v1027, 0
        %v1186 = vsel %vm1094, %v1028, 0
        %v1189 = vsel %vm1094, %v1029, 0
        %1191 = vmatprep.subr.mxu0 0.0
        %1192 = vmatpush1.xpose.msra.mxu0 %v1144
        %1193 = vmatprep.subr.mxu0 0.0
        %1194 = vmatpush1.xpose.msra.mxu0 %v1147
        %1195 = vmatprep.subr.mxu0 0.0
        %1196 = vmatpush1.xpose.msra.mxu0 %v1150
        %1197 = vmatprep.subr.mxu0 0.0
        %1198 = vmatpush1.xpose.msra.mxu0 %v1153
        %1199 = vmatprep.subr.mxu0 0.0
        %1200 = vmatpush1.xpose.msra.mxu0 %v1156
        %1201 = vmatprep.subr.mxu0 0.0
        %1202 = vmatpush1.xpose.msra.mxu0 %v1159
        %1203 = vmatprep.subr.mxu0 0.0
        %1204 = vmatpush1.xpose.msra.mxu0 %v1162
        %1205 = vmatprep.subr.mxu0 0.0
        %1206 = vmatpush1.xpose.msra.mxu0 %v1165
        %1207 = vmatprep.subr.mxu0 0.0
        %1208 = vmatpush1.xpose.msra.mxu0 %v1168
        %1209 = vmatprep.subr.mxu0 0.0
        %1210 = vmatpush1.xpose.msra.mxu0 %v1171
        %1211 = vmatprep.subr.mxu0 0.0
        %1212 = vmatpush1.xpose.msra.mxu0 %v1174
        %1213 = vmatprep.subr.mxu0 0.0
        %1214 = vmatpush1.xpose.msra.mxu0 %v1177
        %1215 = vmatprep.subr.mxu0 0.0
        %1216 = vmatpush1.xpose.msra.mxu0 %v1180
        %1217 = vmatprep.subr.mxu0 0.0
        %1218 = vmatpush1.xpose.msra.mxu0 %v1183
        %1219 = vmatprep.subr.mxu0 0.0
        %1220 = vmatpush1.xpose.msra.mxu0 %v1186
        %1221 = vmatprep.subr.mxu0 0.0
        %1222 = vmatpush1.xpose.msra.mxu0 %v1189
        %1223 = vmatprep.subr.mxu0 0.0
        %1224 = vmatpush1.xpose.msra.mxu0 0.0
        %1225 = vmatprep.subr.mxu0 0.0
        %1226 = vmatpush1.xpose.msra.mxu0 0.0
        %1227 = vmatprep.subr.mxu0 0.0
        %1228 = vmatpush1.xpose.msra.mxu0 0.0
        %1229 = vmatprep.subr.mxu0 0.0
        %1230 = vmatpush1.xpose.msra.mxu0 0.0
        %1231 = vmatprep.subr.mxu0 0.0
        %1232 = vmatpush1.xpose.msra.mxu0 0.0
        %1233 = vmatprep.subr.mxu0 0.0
        %1234 = vmatpush1.xpose.msra.mxu0 0.0
        %1235 = vmatprep.subr.mxu0 0.0
        %1236 = vmatpush1.xpose.msra.mxu0 0.0
        %1237 = vmatprep.subr.mxu0 0.0
        %1238 = vmatpush1.xpose.msra.mxu0 0.0
        %1239 = vmatprep.subr.mxu0 0.0
        %1240 = vmatpush1.xpose.msra.mxu0 0.0
        %1241 = vmatprep.subr.mxu0 0.0
        %1242 = vmatpush1.xpose.msra.mxu0 0.0
        %1243 = vmatprep.subr.mxu0 0.0
        %1244 = vmatpush1.xpose.msra.mxu0 0.0
        %1245 = vmatprep.subr.mxu0 0.0
        %1246 = vmatpush1.xpose.msra.mxu0 0.0
        %1247 = vmatprep.subr.mxu0 0.0
        %1248 = vmatpush1.xpose.msra.mxu0 0.0
        %1249 = vmatprep.subr.mxu0 0.0
        %1250 = vmatpush1.xpose.msra.mxu0 0.0
        %1251 = vmatprep.subr.mxu0 0.0
        %1252 = vmatpush1.xpose.msra.mxu0 0.0
        %1253 = vmatprep.subr.mxu0 0.0
        %1254 = vmatpush1.xpose.msra.mxu0 0.0
        %1255 = vmatprep.mubr.f32.mxu0 0.0
        %1256 = vmatmul.mubr.f32.gmra.mrb[0].mxu0 %v1096
        %v1257 = vpop.f32.mrb[0].mxu0
        %v1258 = vadd.f32 0.0, %v1257
        %v1259 = vpop.f32.mrb[0].mxu0
        %1260 = vmatprep.mubr.f32.mxu0 0.0
        %1261 = vmatmul.mubr.f32.gmra.mrb[0].mxu0 %v1099
        %v1262 = vpop.f32.mrb[0].mxu0
        %v1263 = vadd.f32 0.0, %v1262
        %v1264 = vpop.f32.mrb[0].mxu0
        %1265 = vmatprep.mubr.f32.mxu0 0.0
        %1266 = vmatmul.mubr.f32.gmra.mrb[0].mxu0 %v1102
        %v1267 = vpop.f32.mrb[0].mxu0
        %v1268 = vadd.f32 0.0, %v1267
        %v1269 = vpop.f32.mrb[0].mxu0
        %1270 = vmatprep.mubr.f32.mxu0 0.0
        %1271 = vmatmul.mubr.f32.gmra.mrb[0].mxu0 %v1105
        %v1272 = vpop.f32.mrb[0].mxu0
        %v1273 = vadd.f32 0.0, %v1272
        %v1274 = vpop.f32.mrb[0].mxu0
        %1275 = vmatprep.mubr.f32.mxu0 0.0
        %1276 = vmatmul.mubr.f32.gmra.mrb[0].mxu0 %v1108
        %v1277 = vpop.f32.mrb[0].mxu0
        %v1278 = vadd.f32 0.0, %v1277
        %v1279 = vpop.f32.mrb[0].mxu0
        %1280 = vmatprep.mubr.f32.mxu0 0.0
        %1281 = vmatmul.mubr.f32.gmra.mrb[0].mxu0 %v1111
        %v1282 = vpop.f32.mrb[0].mxu0
        %v1283 = vadd.f32 0.0, %v1282
        %v1284 = vpop.f32.mrb[0].mxu0
        %1285 = vmatprep.mubr.f32.mxu0 0.0
        %1286 = vmatmul.mubr.f32.gmra.mrb[0].mxu0 %v1114
        %v1287 = vpop.f32.mrb[0].mxu0
        %v1288 = vadd.f32 0.0, %v1287
        %v1289 = vpop.f32.mrb[0].mxu0
        %1290 = vmatprep.mubr.f32.mxu0 0.0
        %1291 = vmatmul.mubr.f32.gmra.mrb[0].mxu0 %v1117
        %v1292 = vpop.f32.mrb[0].mxu0
        %v1293 = vadd.f32 0.0, %v1292
        %v1294 = vpop.f32.mrb[0].mxu0
        %1295 = vmatprep.mubr.f32.mxu0 0.0
        %1296 = vmatmul.mubr.f32.gmra.mrb[0].mxu0 %v1120
        %v1297 = vpop.f32.mrb[0].mxu0
        %v1298 = vadd.f32 0.0, %v1297
        %v1299 = vpop.f32.mrb[0].mxu0
        %1300 = vmatprep.mubr.f32.mxu0 0.0
        %1301 = vmatmul.mubr.f32.gmra.mrb[0].mxu0 %v1123
        %v1302 = vpop.f32.mrb[0].mxu0
        %v1303 = vadd.f32 0.0, %v1302
        %v1304 = vpop.f32.mrb[0].mxu0
        %1305 = vmatprep.mubr.f32.mxu0 0.0
        %1306 = vmatmul.mubr.f32.gmra.mrb[0].mxu0 %v1126
        %v1307 = vpop.f32.mrb[0].mxu0
        %v1308 = vadd.f32 0.0, %v1307
        %v1309 = vpop.f32.mrb[0].mxu0
        %1310 = vmatprep.mubr.f32.mxu0 0.0
        %1311 = vmatmul.mubr.f32.gmra.mrb[0].mxu0 %v1129
        %v1312 = vpop.f32.mrb[0].mxu0
        %v1313 = vadd.f32 0.0, %v1312
        %v1314 = vpop.f32.mrb[0].mxu0
        %1315 = vmatprep.mubr.f32.mxu0 0.0
        %1316 = vmatmul.mubr.f32.gmra.mrb[0].mxu0 %v1132
        %v1317 = vpop.f32.mrb[0].mxu0
        %v1318 = vadd.f32 0.0, %v1317
        %v1319 = vpop.f32.mrb[0].mxu0
        %1320 = vmatprep.mubr.f32.mxu0 0.0
        %1321 = vmatmul.mubr.f32.gmra.mrb[0].mxu0 %v1135
        %v1322 = vpop.f32.mrb[0].mxu0
        %v1323 = vadd.f32 0.0, %v1322
        %v1324 = vpop.f32.mrb[0].mxu0
        %1325 = vmatprep.mubr.f32.mxu0 0.0
        %1326 = vmatmul.mubr.f32.gmra.mrb[0].mxu0 %v1138
        %v1327 = vpop.f32.mrb[0].mxu0
        %v1328 = vadd.f32 0.0, %v1327
        %v1329 = vpop.f32.mrb[0].mxu0
        %1330 = vmatprep.mubr.f32.mxu0 0.0
        %1331 = vmatmul.mubr.f32.gmra.mrb[0].mxu0 %v1141
        %v1332 = vpop.f32.mrb[0].mxu0
        %v1333 = vadd.f32 0.0, %v1332
        %v1334 = vpop.f32.mrb[0].mxu0
        %1335 = vdwg.mxu0
        %v1337 = vsel %vm1094, %v998, 0
        %v1340 = vsel %vm1094, %v999, 0
        %v1343 = vsel %vm1094, %v1000, 0
        %v1346 = vsel %vm1094, %v1001, 0
        %v1349 = vsel %vm1094, %v1002, 0
        %v1352 = vsel %vm1094, %v1003, 0
        %v1355 = vsel %vm1094, %v1004, 0
        %v1358 = vsel %vm1094, %v1005, 0
        %v1361 = vsel %vm1094, %v1006, 0
        %v1364 = vsel %vm1094, %v1007, 0
        %v1367 = vsel %vm1094, %v1008, 0
        %v1370 = vsel %vm1094, %v1009, 0
        %v1373 = vsel %vm1094, %v1010, 0
        %v1376 = vsel %vm1094, %v1011, 0
        %v1379 = vsel %vm1094, %v1012, 0
        %v1382 = vsel %vm1094, %v1013, 0
        %v1385 = vsel %vm1094, %v1030, 0
        %v1388 = vsel %vm1094, %v1031, 0
        %v1391 = vsel %vm1094, %v1032, 0
        %v1394 = vsel %vm1094, %v1033, 0
        %v1397 = vsel %vm1094, %v1034, 0
        %v1400 = vsel %vm1094, %v1035, 0
        %v1403 = vsel %vm1094, %v1036, 0
        %v1406 = vsel %vm1094, %v1037, 0
        %v1409 = vsel %vm1094, %v1038, 0
        %v1412 = vsel %vm1094, %v1039, 0
        %v1415 = vsel %vm1094, %v1040, 0
        %v1418 = vsel %vm1094, %v1041, 0
        %v1421 = vsel %vm1094, %v1042, 0
        %v1424 = vsel %vm1094, %v1043, 0
        %v1427 = vsel %vm1094, %v1044, 0
        %v1430 = vsel %vm1094, %v1045, 0
        %1432 = vmatprep.subr.mxu0 0.0
        %1433 = vmatpush1.xpose.msra.mxu0 %v1385
        %1434 = vmatprep.subr.mxu0 0.0
        %1435 = vmatpush1.xpose.msra.mxu0 %v1388
        %1436 = vmatprep.subr.mxu0 0.0
        %1437 = vmatpush1.xpose.msra.mxu0 %v1391
        %1438 = vmatprep.subr.mxu0 0.0
        %1439 = vmatpush1.xpose.msra.mxu0 %v1394
        %1440 = vmatprep.subr.mxu0 0.0
        %1441 = vmatpush1.xpose.msra.mxu0 %v1397
        %1442 = vmatprep.subr.mxu0 0.0
        %1443 = vmatpush1.xpose.msra.mxu0 %v1400
        %1444 = vmatprep.subr.mxu0 0.0
        %1445 = vmatpush1.xpose.msra.mxu0 %v1403
        %1446 = vmatprep.subr.mxu0 0.0
        %1447 = vmatpush1.xpose.msra.mxu0 %v1406
        %1448 = vmatprep.subr.mxu0 0.0
        %1449 = vmatpush1.xpose.msra.mxu0 %v1409
        %1450 = vmatprep.subr.mxu0 0.0
        %1451 = vmatpush1.xpose.msra.mxu0 %v1412
        %1452 = vmatprep.subr.mxu0 0.0
        %1453 = vmatpush1.xpose.msra.mxu0 %v1415
        %1454 = vmatprep.subr.mxu0 0.0
        %1455 = vmatpush1.xpose.msra.mxu0 %v1418
        %1456 = vmatprep.subr.mxu0 0.0
        %1457 = vmatpush1.xpose.msra.mxu0 %v1421
        %1458 = vmatprep.subr.mxu0 0.0
        %1459 = vmatpush1.xpose.msra.mxu0 %v1424
        %1460 = vmatprep.subr.mxu0 0.0
        %1461 = vmatpush1.xpose.msra.mxu0 %v1427
        %1462 = vmatprep.subr.mxu0 0.0
        %1463 = vmatpush1.xpose.msra.mxu0 %v1430
        %1464 = vmatprep.subr.mxu0 0.0
        %1465 = vmatpush1.xpose.msra.mxu0 0.0
        %1466 = vmatprep.subr.mxu0 0.0
        %1467 = vmatpush1.xpose.msra.mxu0 0.0
        %1468 = vmatprep.subr.mxu0 0.0
        %1469 = vmatpush1.xpose.msra.mxu0 0.0
        %1470 = vmatprep.subr.mxu0 0.0
        %1471 = vmatpush1.xpose.msra.mxu0 0.0
        %1472 = vmatprep.subr.mxu0 0.0
        %1473 = vmatpush1.xpose.msra.mxu0 0.0
        %1474 = vmatprep.subr.mxu0 0.0
        %1475 = vmatpush1.xpose.msra.mxu0 0.0
        %1476 = vmatprep.subr.mxu0 0.0
        %1477 = vmatpush1.xpose.msra.mxu0 0.0
        %1478 = vmatprep.subr.mxu0 0.0
        %1479 = vmatpush1.xpose.msra.mxu0 0.0
        %1480 = vmatprep.subr.mxu0 0.0
        %1481 = vmatpush1.xpose.msra.mxu0 0.0
        %1482 = vmatprep.subr.mxu0 0.0
        %1483 = vmatpush1.xpose.msra.mxu0 0.0
        %1484 = vmatprep.subr.mxu0 0.0
        %1485 = vmatpush1.xpose.msra.mxu0 0.0
        %1486 = vmatprep.subr.mxu0 0.0
        %1487 = vmatpush1.xpose.msra.mxu0 0.0
        %1488 = vmatprep.subr.mxu0 0.0
        %1489 = vmatpush1.xpose.msra.mxu0 0.0
        %1490 = vmatprep.subr.mxu0 0.0
        %1491 = vmatpush1.xpose.msra.mxu0 0.0
        %1492 = vmatprep.subr.mxu0 0.0
        %1493 = vmatpush1.xpose.msra.mxu0 0.0
        %1494 = vmatprep.subr.mxu0 0.0
        %1495 = vmatpush1.xpose.msra.mxu0 0.0
        %1496 = vmatprep.mubr.f32.mxu0 0.0
        %1497 = vmatmul.mubr.f32.gmra.mrb[0].mxu0 %v1337
        %v1498 = vpop.f32.mrb[0].mxu0
        %v1499 = vadd.f32 0.0, %v1498
        %v1500 = vpop.f32.mrb[0].mxu0
        %1501 = vmatprep.mubr.f32.mxu0 0.0
        %1502 = vmatmul.mubr.f32.gmra.mrb[0].mxu0 %v1340
        %v1503 = vpop.f32.mrb[0].mxu0
        %v1504 = vadd.f32 0.0, %v1503
        %v1505 = vpop.f32.mrb[0].mxu0
        %1506 = vmatprep.mubr.f32.mxu0 0.0
        %1507 = vmatmul.mubr.f32.gmra.mrb[0].mxu0 %v1343
        %v1508 = vpop.f32.mrb[0].mxu0
        %v1509 = vadd.f32 0.0, %v1508
        %v1510 = vpop.f32.mrb[0].mxu0
        %1511 = vmatprep.mubr.f32.mxu0 0.0
        %1512 = vmatmul.mubr.f32.gmra.mrb[0].mxu0 %v1346
        %v1513 = vpop.f32.mrb[0].mxu0
        %v1514 = vadd.f32 0.0, %v1513
        %v1515 = vpop.f32.mrb[0].mxu0
        %1516 = vmatprep.mubr.f32.mxu0 0.0
        %1517 = vmatmul.mubr.f32.gmra.mrb[0].mxu0 %v1349
        %v1518 = vpop.f32.mrb[0].mxu0
        %v1519 = vadd.f32 0.0, %v1518
        %v1520 = vpop.f32.mrb[0].mxu0
        %1521 = vmatprep.mubr.f32.mxu0 0.0
        %1522 = vmatmul.mubr.f32.gmra.mrb[0].mxu0 %v1352
        %v1523 = vpop.f32.mrb[0].mxu0
        %v1524 = vadd.f32 0.0, %v1523
        %v1525 = vpop.f32.mrb[0].mxu0
        %1526 = vmatprep.mubr.f32.mxu0 0.0
        %1527 = vmatmul.mubr.f32.gmra.mrb[0].mxu0 %v1355
        %v1528 = vpop.f32.mrb[0].mxu0
        %v1529 = vadd.f32 0.0, %v1528
        %v1530 = vpop.f32.mrb[0].mxu0
        %1531 = vmatprep.mubr.f32.mxu0 0.0
        %1532 = vmatmul.mubr.f32.gmra.mrb[0].mxu0 %v1358
        %v1533 = vpop.f32.mrb[0].mxu0
        %v1534 = vadd.f32 0.0, %v1533
        %v1535 = vpop.f32.mrb[0].mxu0
        %1536 = vmatprep.mubr.f32.mxu0 0.0
        %1537 = vmatmul.mubr.f32.gmra.mrb[0].mxu0 %v1361
        %v1538 = vpop.f32.mrb[0].mxu0
        %v1539 = vadd.f32 0.0, %v1538
        %v1540 = vpop.f32.mrb[0].mxu0
        %1541 = vmatprep.mubr.f32.mxu0 0.0
        %1542 = vmatmul.mubr.f32.gmra.mrb[0].mxu0 %v1364
        %v1543 = vpop.f32.mrb[0].mxu0
        %v1544 = vadd.f32 0.0, %v1543
        %v1545 = vpop.f32.mrb[0].mxu0
        %1546 = vmatprep.mubr.f32.mxu0 0.0
        %1547 = vmatmul.mubr.f32.gmra.mrb[0].mxu0 %v1367
        %v1548 = vpop.f32.mrb[0].mxu0
        %v1549 = vadd.f32 0.0, %v1548
        %v1550 = vpop.f32.mrb[0].mxu0
        %1551 = vmatprep.mubr.f32.mxu0 0.0
        %1552 = vmatmul.mubr.f32.gmra.mrb[0].mxu0 %v1370
        %v1553 = vpop.f32.mrb[0].mxu0
        %v1554 = vadd.f32 0.0, %v1553
        %v1555 = vpop.f32.mrb[0].mxu0
        %1556 = vmatprep.mubr.f32.mxu0 0.0
        %1557 = vmatmul.mubr.f32.gmra.mrb[0].mxu0 %v1373
        %v1558 = vpop.f32.mrb[0].mxu0
        %v1559 = vadd.f32 0.0, %v1558
        %v1560 = vpop.f32.mrb[0].mxu0
        %1561 = vmatprep.mubr.f32.mxu0 0.0
        %1562 = vmatmul.mubr.f32.gmra.mrb[0].mxu0 %v1376
        %v1563 = vpop.f32.mrb[0].mxu0
        %v1564 = vadd.f32 0.0, %v1563
        %v1565 = vpop.f32.mrb[0].mxu0
        %1566 = vmatprep.mubr.f32.mxu0 0.0
        %1567 = vmatmul.mubr.f32.gmra.mrb[0].mxu0 %v1379
        %v1568 = vpop.f32.mrb[0].mxu0
        %v1569 = vadd.f32 0.0, %v1568
        %v1570 = vpop.f32.mrb[0].mxu0
        %1571 = vmatprep.mubr.f32.mxu0 0.0
        %1572 = vmatmul.mubr.f32.gmra.mrb[0].mxu0 %v1382
        %v1573 = vpop.f32.mrb[0].mxu0
        %v1574 = vadd.f32 0.0, %v1573
        %v1575 = vpop.f32.mrb[0].mxu0
        %1576 = vdwg.mxu0
        %v1577 = vmul.f32 %v1258, %v1078
        %v1578 = vmul.f32 %v1263, %v1079
        %v1579 = vmul.f32 %v1268, %v1080
        %v1580 = vmul.f32 %v1273, %v1081
        %v1581 = vmul.f32 %v1278, %v1082
        %v1582 = vmul.f32 %v1283, %v1083
        %v1583 = vmul.f32 %v1288, %v1084
        %v1584 = vmul.f32 %v1293, %v1085
        %v1585 = vmul.f32 %v1298, %v1086
        %v1586 = vmul.f32 %v1303, %v1087
        %v1587 = vmul.f32 %v1308, %v1088
        %v1588 = vmul.f32 %v1313, %v1089
        %v1589 = vmul.f32 %v1318, %v1090
        %v1590 = vmul.f32 %v1323, %v1091
        %v1591 = vmul.f32 %v1328, %v1092
        %v1592 = vmul.f32 %v1333, %v1093
        %v1593 = vmul.f32 %v1499, %v1078
        %v1594 = vmul.f32 %v1504, %v1079
        %v1595 = vmul.f32 %v1509, %v1080
        %v1596 = vmul.f32 %v1514, %v1081
        %v1597 = vmul.f32 %v1519, %v1082
        %v1598 = vmul.f32 %v1524, %v1083
        %v1599 = vmul.f32 %v1529, %v1084
        %v1600 = vmul.f32 %v1534, %v1085
        %v1601 = vmul.f32 %v1539, %v1086
        %v1602 = vmul.f32 %v1544, %v1087
        %v1603 = vmul.f32 %v1549, %v1088
        %v1604 = vmul.f32 %v1554, %v1089
        %v1605 = vmul.f32 %v1559, %v1090
        %v1606 = vmul.f32 %v1564, %v1091
        %v1607 = vmul.f32 %v1569, %v1092
        %v1608 = vmul.f32 %v1574, %v1093
        %1609 = vst [vmem:[%s906] sm:$0xff] %v1577
        %1610 = vst [vmem:[%s906 + $0x8] sm:$0xff] %v1578
        %1611 = vst [vmem:[%s906 + $0x10] sm:$0xff] %v1579
        %1612 = vst [vmem:[%s906 + $0x18] sm:$0xff] %v1580
        %1613 = vst [vmem:[%s906 + $0x20] sm:$0xff] %v1581
        %1614 = vst [vmem:[%s906 + $0x28] sm:$0xff] %v1582
        %1615 = vst [vmem:[%s906 + $0x30] sm:$0xff] %v1583
        %1616 = vst [vmem:[%s906 + $0x38] sm:$0xff] %v1584
        %1617 = vst [vmem:[%s906 + $0x40] sm:$0xff] %v1585
        %1618 = vst [vmem:[%s906 + $0x48] sm:$0xff] %v1586
        %1619 = vst [vmem:[%s906 + $0x50] sm:$0xff] %v1587
        %1620 = vst [vmem:[%s906 + $0x58] sm:$0xff] %v1588
        %1621 = vst [vmem:[%s906 + $0x60] sm:$0xff] %v1589
        %1622 = vst [vmem:[%s906 + $0x68] sm:$0xff] %v1590
        %1623 = vst [vmem:[%s906 + $0x70] sm:$0xff] %v1591
        %1624 = vst [vmem:[%s906 + $0x78] sm:$0xff] %v1592
        %1625 = vst [vmem:[%s906 + $0x80] sm:$0xff] %v1593
        %1626 = vst [vmem:[%s906 + $0x88] sm:$0xff] %v1594
        %1627 = vst [vmem:[%s906 + $0x90] sm:$0xff] %v1595
        %1628 = vst [vmem:[%s906 + $0x98] sm:$0xff] %v1596
        %1629 = vst [vmem:[%s906 + $0xa0] sm:$0xff] %v1597
        %1630 = vst [vmem:[%s906 + $0xa8] sm:$0xff] %v1598
        %1631 = vst [vmem:[%s906 + $0xb0] sm:$0xff] %v1599
        %1632 = vst [vmem:[%s906 + $0xb8] sm:$0xff] %v1600
        %1633 = vst [vmem:[%s906 + $0xc0] sm:$0xff] %v1601
        %1634 = vst [vmem:[%s906 + $0xc8] sm:$0xff] %v1602
        %1635 = vst [vmem:[%s906 + $0xd0] sm:$0xff] %v1603
        %1636 = vst [vmem:[%s906 + $0xd8] sm:$0xff] %v1604
        %1637 = vst [vmem:[%s906 + $0xe0] sm:$0xff] %v1605
        %1638 = vst [vmem:[%s906 + $0xe8] sm:$0xff] %v1606
        %1639 = vst [vmem:[%s906 + $0xf0] sm:$0xff] %v1607
        %1640 = vst [vmem:[%s906 + $0xf8] sm:$0xff] %v1608
        %v1641 = vld [vmem:[%s899] sm:$0xff]
        %v1642 = vld [vmem:[%s899 + $0x8] sm:$0xff]
        %v1643 = vld [vmem:[%s899 + $0x10] sm:$0xff]
        %v1644 = vld [vmem:[%s899 + $0x18] sm:$0xff]
        %v1645 = vld [vmem:[%s899 + $0x20] sm:$0xff]
        %v1646 = vld [vmem:[%s899 + $0x28] sm:$0xff]
        %v1647 = vld [vmem:[%s899 + $0x30] sm:$0xff]
        %v1648 = vld [vmem:[%s899 + $0x38] sm:$0xff]
        %v1649 = vld [vmem:[%s899 + $0x40] sm:$0xff]
        %v1650 = vld [vmem:[%s899 + $0x48] sm:$0xff]
        %v1651 = vld [vmem:[%s899 + $0x50] sm:$0xff]
        %v1652 = vld [vmem:[%s899 + $0x58] sm:$0xff]
        %v1653 = vld [vmem:[%s899 + $0x60] sm:$0xff]
        %v1654 = vld [vmem:[%s899 + $0x68] sm:$0xff]
        %v1655 = vld [vmem:[%s899 + $0x70] sm:$0xff]
        %v1656 = vld [vmem:[%s899 + $0x78] sm:$0xff]
        %v1657 = vld [vmem:[%s899 + $0x80] sm:$0xff]
        %v1658 = vld [vmem:[%s899 + $0x88] sm:$0xff]
        %v1659 = vld [vmem:[%s899 + $0x90] sm:$0xff]
        %v1660 = vld [vmem:[%s899 + $0x98] sm:$0xff]
        %v1661 = vld [vmem:[%s899 + $0xa0] sm:$0xff]
        %v1662 = vld [vmem:[%s899 + $0xa8] sm:$0xff]
        %v1663 = vld [vmem:[%s899 + $0xb0] sm:$0xff]
        %v1664 = vld [vmem:[%s899 + $0xb8] sm:$0xff]
        %v1665 = vld [vmem:[%s899 + $0xc0] sm:$0xff]
        %v1666 = vld [vmem:[%s899 + $0xc8] sm:$0xff]
        %v1667 = vld [vmem:[%s899 + $0xd0] sm:$0xff]
        %v1668 = vld [vmem:[%s899 + $0xd8] sm:$0xff]
        %v1669 = vld [vmem:[%s899 + $0xe0] sm:$0xff]
        %v1670 = vld [vmem:[%s899 + $0xe8] sm:$0xff]
        %v1671 = vld [vmem:[%s899 + $0xf0] sm:$0xff]
        %v1672 = vld [vmem:[%s899 + $0xf8] sm:$0xff]
        %1673 = vmatprep.subr.mxu0 0.0
        %1674 = vmatpush1.msra.mxu0 %v1046
        %1675 = vmatprep.subr.mxu0 0.0
        %1676 = vmatpush1.msra.mxu0 %v1047
        %1677 = vmatprep.subr.mxu0 0.0
        %1678 = vmatpush1.msra.mxu0 %v1048
        %1679 = vmatprep.subr.mxu0 0.0
        %1680 = vmatpush1.msra.mxu0 %v1049
        %1681 = vmatprep.subr.mxu0 0.0
        %1682 = vmatpush1.msra.mxu0 %v1050
        %1683 = vmatprep.subr.mxu0 0.0
        %1684 = vmatpush1.msra.mxu0 %v1051
        %1685 = vmatprep.subr.mxu0 0.0
        %1686 = vmatpush1.msra.mxu0 %v1052
        %1687 = vmatprep.subr.mxu0 0.0
        %1688 = vmatpush1.msra.mxu0 %v1053
        %1689 = vmatprep.subr.mxu0 0.0
        %1690 = vmatpush1.msra.mxu0 %v1054
        %1691 = vmatprep.subr.mxu0 0.0
        %1692 = vmatpush1.msra.mxu0 %v1055
        %1693 = vmatprep.subr.mxu0 0.0
        %1694 = vmatpush1.msra.mxu0 %v1056
        %1695 = vmatprep.subr.mxu0 0.0
        %1696 = vmatpush1.msra.mxu0 %v1057
        %1697 = vmatprep.subr.mxu0 0.0
        %1698 = vmatpush1.msra.mxu0 %v1058
        %1699 = vmatprep.subr.mxu0 0.0
        %1700 = vmatpush1.msra.mxu0 %v1059
        %1701 = vmatprep.subr.mxu0 0.0
        %1702 = vmatpush1.msra.mxu0 %v1060
        %1703 = vmatprep.subr.mxu0 0.0
        %1704 = vmatpush1.msra.mxu0 %v1061
        %1705 = vmatprep.subr.mxu0 0.0
        %1706 = vmatpush1.msra.mxu0 0.0
        %1707 = vmatprep.subr.mxu0 0.0
        %1708 = vmatpush1.msra.mxu0 0.0
        %1709 = vmatprep.subr.mxu0 0.0
        %1710 = vmatpush1.msra.mxu0 0.0
        %1711 = vmatprep.subr.mxu0 0.0
        %1712 = vmatpush1.msra.mxu0 0.0
        %1713 = vmatprep.subr.mxu0 0.0
        %1714 = vmatpush1.msra.mxu0 0.0
        %1715 = vmatprep.subr.mxu0 0.0
        %1716 = vmatpush1.msra.mxu0 0.0
        %1717 = vmatprep.subr.mxu0 0.0
        %1718 = vmatpush1.msra.mxu0 0.0
        %1719 = vmatprep.subr.mxu0 0.0
        %1720 = vmatpush1.msra.mxu0 0.0
        %1721 = vmatprep.subr.mxu0 0.0
        %1722 = vmatpush1.msra.mxu0 0.0
        %1723 = vmatprep.subr.mxu0 0.0
        %1724 = vmatpush1.msra.mxu0 0.0
        %1725 = vmatprep.subr.mxu0 0.0
        %1726 = vmatpush1.msra.mxu0 0.0
        %1727 = vmatprep.subr.mxu0 0.0
        %1728 = vmatpush1.msra.mxu0 0.0
        %1729 = vmatprep.subr.mxu0 0.0
        %1730 = vmatpush1.msra.mxu0 0.0
        %1731 = vmatprep.subr.mxu0 0.0
        %1732 = vmatpush1.msra.mxu0 0.0
        %1733 = vmatprep.subr.mxu0 0.0
        %1734 = vmatpush1.msra.mxu0 0.0
        %1735 = vmatprep.subr.mxu0 0.0
        %1736 = vmatpush1.msra.mxu0 0.0
        %1737 = vmatprep.mubr.f32.mxu0 0.0
        %1738 = vmatmul.mubr.f32.gmra.mrb[0].mxu0 %v1577
        %v1739 = vpop.f32.mrb[0].mxu0
        %v1740 = vadd.f32 0.0, %v1739
        %v1741 = vpop.f32.mrb[0].mxu0
        %1742 = vmatprep.mubr.f32.mxu0 0.0
        %1743 = vmatmul.mubr.f32.gmra.mrb[0].mxu0 %v1578
        %v1744 = vpop.f32.mrb[0].mxu0
        %v1745 = vadd.f32 0.0, %v1744
        %v1746 = vpop.f32.mrb[0].mxu0
        %1747 = vmatprep.mubr.f32.mxu0 0.0
        %1748 = vmatmul.mubr.f32.gmra.mrb[0].mxu0 %v1579
        %v1749 = vpop.f32.mrb[0].mxu0
        %v1750 = vadd.f32 0.0, %v1749
        %v1751 = vpop.f32.mrb[0].mxu0
        %1752 = vmatprep.mubr.f32.mxu0 0.0
        %1753 = vmatmul.mubr.f32.gmra.mrb[0].mxu0 %v1580
        %v1754 = vpop.f32.mrb[0].mxu0
        %v1755 = vadd.f32 0.0, %v1754
        %v1756 = vpop.f32.mrb[0].mxu0
        %1757 = vmatprep.mubr.f32.mxu0 0.0
        %1758 = vmatmul.mubr.f32.gmra.mrb[0].mxu0 %v1581
        %v1759 = vpop.f32.mrb[0].mxu0
        %v1760 = vadd.f32 0.0, %v1759
        %v1761 = vpop.f32.mrb[0].mxu0
        %1762 = vmatprep.mubr.f32.mxu0 0.0
        %1763 = vmatmul.mubr.f32.gmra.mrb[0].mxu0 %v1582
        %v1764 = vpop.f32.mrb[0].mxu0
        %v1765 = vadd.f32 0.0, %v1764
        %v1766 = vpop.f32.mrb[0].mxu0
        %1767 = vmatprep.mubr.f32.mxu0 0.0
        %1768 = vmatmul.mubr.f32.gmra.mrb[0].mxu0 %v1583
        %v1769 = vpop.f32.mrb[0].mxu0
        %v1770 = vadd.f32 0.0, %v1769
        %v1771 = vpop.f32.mrb[0].mxu0
        %1772 = vmatprep.mubr.f32.mxu0 0.0
        %1773 = vmatmul.mubr.f32.gmra.mrb[0].mxu0 %v1584
        %v1774 = vpop.f32.mrb[0].mxu0
        %v1775 = vadd.f32 0.0, %v1774
        %v1776 = vpop.f32.mrb[0].mxu0
        %1777 = vmatprep.mubr.f32.mxu0 0.0
        %1778 = vmatmul.mubr.f32.gmra.mrb[0].mxu0 %v1585
        %v1779 = vpop.f32.mrb[0].mxu0
        %v1780 = vadd.f32 0.0, %v1779
        %v1781 = vpop.f32.mrb[0].mxu0
        %1782 = vmatprep.mubr.f32.mxu0 0.0
        %1783 = vmatmul.mubr.f32.gmra.mrb[0].mxu0 %v1586
        %v1784 = vpop.f32.mrb[0].mxu0
        %v1785 = vadd.f32 0.0, %v1784
        %v1786 = vpop.f32.mrb[0].mxu0
        %1787 = vmatprep.mubr.f32.mxu0 0.0
        %1788 = vmatmul.mubr.f32.gmra.mrb[0].mxu0 %v1587
        %v1789 = vpop.f32.mrb[0].mxu0
        %v1790 = vadd.f32 0.0, %v1789
        %v1791 = vpop.f32.mrb[0].mxu0
        %1792 = vmatprep.mubr.f32.mxu0 0.0
        %1793 = vmatmul.mubr.f32.gmra.mrb[0].mxu0 %v1588
        %v1794 = vpop.f32.mrb[0].mxu0
        %v1795 = vadd.f32 0.0, %v1794
        %v1796 = vpop.f32.mrb[0].mxu0
        %1797 = vmatprep.mubr.f32.mxu0 0.0
        %1798 = vmatmul.mubr.f32.gmra.mrb[0].mxu0 %v1589
        %v1799 = vpop.f32.mrb[0].mxu0
        %v1800 = vadd.f32 0.0, %v1799
        %v1801 = vpop.f32.mrb[0].mxu0
        %1802 = vmatprep.mubr.f32.mxu0 0.0
        %1803 = vmatmul.mubr.f32.gmra.mrb[0].mxu0 %v1590
        %v1804 = vpop.f32.mrb[0].mxu0
        %v1805 = vadd.f32 0.0, %v1804
        %v1806 = vpop.f32.mrb[0].mxu0
        %1807 = vmatprep.mubr.f32.mxu0 0.0
        %1808 = vmatmul.mubr.f32.gmra.mrb[0].mxu0 %v1591
        %v1809 = vpop.f32.mrb[0].mxu0
        %v1810 = vadd.f32 0.0, %v1809
        %v1811 = vpop.f32.mrb[0].mxu0
        %1812 = vmatprep.mubr.f32.mxu0 0.0
        %1813 = vmatmul.mubr.f32.gmra.mrb[0].mxu0 %v1592
        %v1814 = vpop.f32.mrb[0].mxu0
        %v1815 = vadd.f32 0.0, %v1814
        %v1816 = vpop.f32.mrb[0].mxu0
        %1817 = vdwg.mxu0
        %1818 = vmatprep.subr.mxu0 0.0
        %1819 = vmatpush1.msra.mxu0 %v1062
        %1820 = vmatprep.subr.mxu0 0.0
        %1821 = vmatpush1.msra.mxu0 %v1063
        %1822 = vmatprep.subr.mxu0 0.0
        %1823 = vmatpush1.msra.mxu0 %v1064
        %1824 = vmatprep.subr.mxu0 0.0
        %1825 = vmatpush1.msra.mxu0 %v1065
        %1826 = vmatprep.subr.mxu0 0.0
        %1827 = vmatpush1.msra.mxu0 %v1066
        %1828 = vmatprep.subr.mxu0 0.0
        %1829 = vmatpush1.msra.mxu0 %v1067
        %1830 = vmatprep.subr.mxu0 0.0
        %1831 = vmatpush1.msra.mxu0 %v1068
        %1832 = vmatprep.subr.mxu0 0.0
        %1833 = vmatpush1.msra.mxu0 %v1069
        %1834 = vmatprep.subr.mxu0 0.0
        %1835 = vmatpush1.msra.mxu0 %v1070
        %1836 = vmatprep.subr.mxu0 0.0
        %1837 = vmatpush1.msra.mxu0 %v1071
        %1838 = vmatprep.subr.mxu0 0.0
        %1839 = vmatpush1.msra.mxu0 %v1072
        %1840 = vmatprep.subr.mxu0 0.0
        %1841 = vmatpush1.msra.mxu0 %v1073
        %1842 = vmatprep.subr.mxu0 0.0
        %1843 = vmatpush1.msra.mxu0 %v1074
        %1844 = vmatprep.subr.mxu0 0.0
        %1845 = vmatpush1.msra.mxu0 %v1075
        %1846 = vmatprep.subr.mxu0 0.0
        %1847 = vmatpush1.msra.mxu0 %v1076
        %1848 = vmatprep.subr.mxu0 0.0
        %1849 = vmatpush1.msra.mxu0 %v1077
        %1850 = vmatprep.subr.mxu0 0.0
        %1851 = vmatpush1.msra.mxu0 0.0
        %1852 = vmatprep.subr.mxu0 0.0
        %1853 = vmatpush1.msra.mxu0 0.0
        %1854 = vmatprep.subr.mxu0 0.0
        %1855 = vmatpush1.msra.mxu0 0.0
        %1856 = vmatprep.subr.mxu0 0.0
        %1857 = vmatpush1.msra.mxu0 0.0
        %1858 = vmatprep.subr.mxu0 0.0
        %1859 = vmatpush1.msra.mxu0 0.0
        %1860 = vmatprep.subr.mxu0 0.0
        %1861 = vmatpush1.msra.mxu0 0.0
        %1862 = vmatprep.subr.mxu0 0.0
        %1863 = vmatpush1.msra.mxu0 0.0
        %1864 = vmatprep.subr.mxu0 0.0
        %1865 = vmatpush1.msra.mxu0 0.0
        %1866 = vmatprep.subr.mxu0 0.0
        %1867 = vmatpush1.msra.mxu0 0.0
        %1868 = vmatprep.subr.mxu0 0.0
        %1869 = vmatpush1.msra.mxu0 0.0
        %1870 = vmatprep.subr.mxu0 0.0
        %1871 = vmatpush1.msra.mxu0 0.0
        %1872 = vmatprep.subr.mxu0 0.0
        %1873 = vmatpush1.msra.mxu0 0.0
        %1874 = vmatprep.subr.mxu0 0.0
        %1875 = vmatpush1.msra.mxu0 0.0
        %1876 = vmatprep.subr.mxu0 0.0
        %1877 = vmatpush1.msra.mxu0 0.0
        %1878 = vmatprep.subr.mxu0 0.0
        %1879 = vmatpush1.msra.mxu0 0.0
        %1880 = vmatprep.subr.mxu0 0.0
        %1881 = vmatpush1.msra.mxu0 0.0
        %1882 = vmatprep.mubr.f32.mxu0 0.0
        %1883 = vmatmul.mubr.f32.gmra.mrb[0].mxu0 %v1593
        %v1884 = vpop.f32.mrb[0].mxu0
        %v1885 = vadd.f32 0.0, %v1884
        %v1886 = vpop.f32.mrb[0].mxu0
        %1887 = vmatprep.mubr.f32.mxu0 0.0
        %1888 = vmatmul.mubr.f32.gmra.mrb[0].mxu0 %v1594
        %v1889 = vpop.f32.mrb[0].mxu0
        %v1890 = vadd.f32 0.0, %v1889
        %v1891 = vpop.f32.mrb[0].mxu0
        %1892 = vmatprep.mubr.f32.mxu0 0.0
        %1893 = vmatmul.mubr.f32.gmra.mrb[0].mxu0 %v1595
        %v1894 = vpop.f32.mrb[0].mxu0
        %v1895 = vadd.f32 0.0, %v1894
        %v1896 = vpop.f32.mrb[0].mxu0
        %1897 = vmatprep.mubr.f32.mxu0 0.0
        %1898 = vmatmul.mubr.f32.gmra.mrb[0].mxu0 %v1596
        %v1899 = vpop.f32.mrb[0].mxu0
        %v1900 = vadd.f32 0.0, %v1899
        %v1901 = vpop.f32.mrb[0].mxu0
        %1902 = vmatprep.mubr.f32.mxu0 0.0
        %1903 = vmatmul.mubr.f32.gmra.mrb[0].mxu0 %v1597
        %v1904 = vpop.f32.mrb[0].mxu0
        %v1905 = vadd.f32 0.0, %v1904
        %v1906 = vpop.f32.mrb[0].mxu0
        %1907 = vmatprep.mubr.f32.mxu0 0.0
        %1908 = vmatmul.mubr.f32.gmra.mrb[0].mxu0 %v1598
        %v1909 = vpop.f32.mrb[0].mxu0
        %v1910 = vadd.f32 0.0, %v1909
        %v1911 = vpop.f32.mrb[0].mxu0
        %1912 = vmatprep.mubr.f32.mxu0 0.0
        %1913 = vmatmul.mubr.f32.gmra.mrb[0].mxu0 %v1599
        %v1914 = vpop.f32.mrb[0].mxu0
        %v1915 = vadd.f32 0.0, %v1914
        %v1916 = vpop.f32.mrb[0].mxu0
        %1917 = vmatprep.mubr.f32.mxu0 0.0
        %1918 = vmatmul.mubr.f32.gmra.mrb[0].mxu0 %v1600
        %v1919 = vpop.f32.mrb[0].mxu0
        %v1920 = vadd.f32 0.0, %v1919
        %v1921 = vpop.f32.mrb[0].mxu0
        %1922 = vmatprep.mubr.f32.mxu0 0.0
        %1923 = vmatmul.mubr.f32.gmra.mrb[0].mxu0 %v1601
        %v1924 = vpop.f32.mrb[0].mxu0
        %v1925 = vadd.f32 0.0, %v1924
        %v1926 = vpop.f32.mrb[0].mxu0
        %1927 = vmatprep.mubr.f32.mxu0 0.0
        %1928 = vmatmul.mubr.f32.gmra.mrb[0].mxu0 %v1602
        %v1929 = vpop.f32.mrb[0].mxu0
        %v1930 = vadd.f32 0.0, %v1929
        %v1931 = vpop.f32.mrb[0].mxu0
        %1932 = vmatprep.mubr.f32.mxu0 0.0
        %1933 = vmatmul.mubr.f32.gmra.mrb[0].mxu0 %v1603
        %v1934 = vpop.f32.mrb[0].mxu0
        %v1935 = vadd.f32 0.0, %v1934
        %v1936 = vpop.f32.mrb[0].mxu0
        %1937 = vmatprep.mubr.f32.mxu0 0.0
        %1938 = vmatmul.mubr.f32.gmra.mrb[0].mxu0 %v1604
        %v1939 = vpop.f32.mrb[0].mxu0
        %v1940 = vadd.f32 0.0, %v1939
        %v1941 = vpop.f32.mrb[0].mxu0
        %1942 = vmatprep.mubr.f32.mxu0 0.0
        %1943 = vmatmul.mubr.f32.gmra.mrb[0].mxu0 %v1605
        %v1944 = vpop.f32.mrb[0].mxu0
        %v1945 = vadd.f32 0.0, %v1944
        %v1946 = vpop.f32.mrb[0].mxu0
        %1947 = vmatprep.mubr.f32.mxu0 0.0
        %1948 = vmatmul.mubr.f32.gmra.mrb[0].mxu0 %v1606
        %v1949 = vpop.f32.mrb[0].mxu0
        %v1950 = vadd.f32 0.0, %v1949
        %v1951 = vpop.f32.mrb[0].mxu0
        %1952 = vmatprep.mubr.f32.mxu0 0.0
        %1953 = vmatmul.mubr.f32.gmra.mrb[0].mxu0 %v1607
        %v1954 = vpop.f32.mrb[0].mxu0
        %v1955 = vadd.f32 0.0, %v1954
        %v1956 = vpop.f32.mrb[0].mxu0
        %1957 = vmatprep.mubr.f32.mxu0 0.0
        %1958 = vmatmul.mubr.f32.gmra.mrb[0].mxu0 %v1608
        %v1959 = vpop.f32.mrb[0].mxu0
        %v1960 = vadd.f32 0.0, %v1959
        %v1961 = vpop.f32.mrb[0].mxu0
        %1962 = vdwg.mxu0
        %v1963 = vadd.f32 %v1641, %v1740
        %v1964 = vadd.f32 %v1642, %v1745
        %v1965 = vadd.f32 %v1643, %v1750
        %v1966 = vadd.f32 %v1644, %v1755
        %v1967 = vadd.f32 %v1645, %v1760
        %v1968 = vadd.f32 %v1646, %v1765
        %v1969 = vadd.f32 %v1647, %v1770
        %v1970 = vadd.f32 %v1648, %v1775
        %v1971 = vadd.f32 %v1649, %v1780
        %v1972 = vadd.f32 %v1650, %v1785
        %v1973 = vadd.f32 %v1651, %v1790
        %v1974 = vadd.f32 %v1652, %v1795
        %v1975 = vadd.f32 %v1653, %v1800
        %v1976 = vadd.f32 %v1654, %v1805
        %v1977 = vadd.f32 %v1655, %v1810
        %v1978 = vadd.f32 %v1656, %v1815
        %v1979 = vadd.f32 %v1657, %v1885
        %v1980 = vadd.f32 %v1658, %v1890
        %v1981 = vadd.f32 %v1659, %v1895
        %v1982 = vadd.f32 %v1660, %v1900
        %v1983 = vadd.f32 %v1661, %v1905
        %v1984 = vadd.f32 %v1662, %v1910
        %v1985 = vadd.f32 %v1663, %v1915
        %v1986 = vadd.f32 %v1664, %v1920
        %v1987 = vadd.f32 %v1665, %v1925
        %v1988 = vadd.f32 %v1666, %v1930
        %v1989 = vadd.f32 %v1667, %v1935
        %v1990 = vadd.f32 %v1668, %v1940
        %v1991 = vadd.f32 %v1669, %v1945
        %v1992 = vadd.f32 %v1670, %v1950
        %v1993 = vadd.f32 %v1671, %v1955
        %v1994 = vadd.f32 %v1672, %v1960
        %1995 = vst.msk [vmem:[%s899] sm:$0xff] %vm1094, %v1963
        %1996 = vst.msk [vmem:[%s899 + $0x8] sm:$0xff] %vm1094, %v1964
        %1997 = vst.msk [vmem:[%s899 + $0x10] sm:$0xff] %vm1094, %v1965
        %1998 = vst.msk [vmem:[%s899 + $0x18] sm:$0xff] %vm1094, %v1966
        %1999 = vst.msk [vmem:[%s899 + $0x20] sm:$0xff] %vm1094, %v1967
        %2000 = vst.msk [vmem:[%s899 + $0x28] sm:$0xff] %vm1094, %v1968
        %2001 = vst.msk [vmem:[%s899 + $0x30] sm:$0xff] %vm1094, %v1969
        %2002 = vst.msk [vmem:[%s899 + $0x38] sm:$0xff] %vm1094, %v1970
        %2003 = vst.msk [vmem:[%s899 + $0x40] sm:$0xff] %vm1094, %v1971
        %2004 = vst.msk [vmem:[%s899 + $0x48] sm:$0xff] %vm1094, %v1972
        %2005 = vst.msk [vmem:[%s899 + $0x50] sm:$0xff] %vm1094, %v1973
        %2006 = vst.msk [vmem:[%s899 + $0x58] sm:$0xff] %vm1094, %v1974
        %2007 = vst.msk [vmem:[%s899 + $0x60] sm:$0xff] %vm1094, %v1975
        %2008 = vst.msk [vmem:[%s899 + $0x68] sm:$0xff] %vm1094, %v1976
        %2009 = vst.msk [vmem:[%s899 + $0x70] sm:$0xff] %vm1094, %v1977
        %2010 = vst.msk [vmem:[%s899 + $0x78] sm:$0xff] %vm1094, %v1978
        %2011 = vst.msk [vmem:[%s899 + $0x80] sm:$0xff] %vm1094, %v1979
        %2012 = vst.msk [vmem:[%s899 + $0x88] sm:$0xff] %vm1094, %v1980
        %2013 = vst.msk [vmem:[%s899 + $0x90] sm:$0xff] %vm1094, %v1981
        %2014 = vst.msk [vmem:[%s899 + $0x98] sm:$0xff] %vm1094, %v1982
        %2015 = vst.msk [vmem:[%s899 + $0xa0] sm:$0xff] %vm1094, %v1983
        %2016 = vst.msk [vmem:[%s899 + $0xa8] sm:$0xff] %vm1094, %v1984
        %2017 = vst.msk [vmem:[%s899 + $0xb0] sm:$0xff] %vm1094, %v1985
        %2018 = vst.msk [vmem:[%s899 + $0xb8] sm:$0xff] %vm1094, %v1986
        %2019 = vst.msk [vmem:[%s899 + $0xc0] sm:$0xff] %vm1094, %v1987
        %2020 = vst.msk [vmem:[%s899 + $0xc8] sm:$0xff] %vm1094, %v1988
        %2021 = vst.msk [vmem:[%s899 + $0xd0] sm:$0xff] %vm1094, %v1989
        %2022 = vst.msk [vmem:[%s899 + $0xd8] sm:$0xff] %vm1094, %v1990
        %2023 = vst.msk [vmem:[%s899 + $0xe0] sm:$0xff] %vm1094, %v1991
        %2024 = vst.msk [vmem:[%s899 + $0xe8] sm:$0xff] %vm1094, %v1992
        %2025 = vst.msk [vmem:[%s899 + $0xf0] sm:$0xff] %vm1094, %v1993
        %2026 = vst.msk [vmem:[%s899 + $0xf8] sm:$0xff] %vm1094, %v1994
        %s2027 = sand.u32 %s163, 1
        %s2028 = sand.u32 %s163, 1
        %s2029 = smul.addr %s2028, 256
        %s2030 = scalar_lea.vmem [#allocation6], %s2029
        %s2031 = sand.u32 %s193, 1
        %s2032 = scalar_lea.sflag [#allocation8], %s2031
        %s2033 = sand.u32 %s193, 1
        %s2034 = smul.addr %s2033, 256
        %s2035 = scalar_lea.vmem [#allocation7], %s2034
        // Predicated region
        $region193: #{tpu_custom_call.1} parent=171 // pred_check
          %p2036 = pneg %p173
        $region194: #{tpu_custom_call.1} parent=171 // pred_check_branch
          %2038 = sbr.rel (%p2036) target = $region196
        $region195: #{tpu_custom_call.1} parent=171 // pred_region
          %s2039 = smul.u32 16, %s26
          %s2040 = smul.addr %s25, 32
          %s2041 = sadd.s32 %s2039, %s2040
          %s2042 = smul.addr %s2041, 8
          %s2043 = scalar_lea.vmem %s4, %s2042
          // Predicated region
          $region197: #{tpu_custom_call.1} parent=195 // pred_check
            _
          $region198: #{tpu_custom_call.1} parent=195 // pred_check_branch
            %2045 = sbr.rel (0) target = $region200
          $region199: #{tpu_custom_call.1} parent=195 // pred_region
            // Predicated region
            $region201: #{tpu_custom_call.1} parent=199 // pred_check
              _
            $region202: #{tpu_custom_call.1} parent=199 // pred_check_branch
              %2047 = sbr.rel (0) target = $region204
            $region203: #{tpu_custom_call.1} parent=199 // pred_region
              // Predicated region
              $region216: #{tpu_custom_call.1} parent=203 // pred_check
                _
              $region217: #{tpu_custom_call.1} parent=203 // pred_check_branch
                %2124 = sbr.rel (0) target = $region219
              $region218: #{tpu_custom_call.1} parent=203 // pred_region
                loop: start=0, step=1, limit=1
                $region220: #{tpu_custom_call.1} parent=218 // loop_pre_header
                  _
                $region221: #{tpu_custom_call.1} parent=218 // loop_header
                  %s2126 = sphi 0, %s2130
                  %p2127 = scmp.ge.s32.totalorder %s2126, 1
                  %s2131 = sphi %s2030, %s2030
                  %s2132 = sphi %s2043, %s2043
                $region222: #{tpu_custom_call.1} parent=218 // loop_header_branch
                  %2129 = sbr.rel (%p2127) target = $region226
                $region223: #{tpu_custom_call.1} parent=218 // loop_body
                  %v2133 = vld [vmem:[%s2131] sm:$0xff]
                  %2134 = vst [vmem:[%s2132] sm:$0xff] %v2133
                  %v2135 = vld [vmem:[%s2131 + $0x8] sm:$0xff]
                  %2136 = vst [vmem:[%s2132 + $0x8] sm:$0xff] %v2135
                  %v2137 = vld [vmem:[%s2131 + $0x10] sm:$0xff]
                  %2138 = vst [vmem:[%s2132 + $0x10] sm:$0xff] %v2137
                  %v2139 = vld [vmem:[%s2131 + $0x18] sm:$0xff]
                  %2140 = vst [vmem:[%s2132 + $0x18] sm:$0xff] %v2139
                  %v2141 = vld [vmem:[%s2131 + $0x20] sm:$0xff]
                  %2142 = vst [vmem:[%s2132 + $0x20] sm:$0xff] %v2141
                  %v2143 = vld [vmem:[%s2131 + $0x28] sm:$0xff]
                  %2144 = vst [vmem:[%s2132 + $0x28] sm:$0xff] %v2143
                  %v2145 = vld [vmem:[%s2131 + $0x30] sm:$0xff]
                  %2146 = vst [vmem:[%s2132 + $0x30] sm:$0xff] %v2145
                  %v2147 = vld [vmem:[%s2131 + $0x38] sm:$0xff]
                  %2148 = vst [vmem:[%s2132 + $0x38] sm:$0xff] %v2147
                  %v2149 = vld [vmem:[%s2131 + $0x40] sm:$0xff]
                  %2150 = vst [vmem:[%s2132 + $0x40] sm:$0xff] %v2149
                  %v2151 = vld [vmem:[%s2131 + $0x48] sm:$0xff]
                  %2152 = vst [vmem:[%s2132 + $0x48] sm:$0xff] %v2151
                  %v2153 = vld [vmem:[%s2131 + $0x50] sm:$0xff]
                  %2154 = vst [vmem:[%s2132 + $0x50] sm:$0xff] %v2153
                  %v2155 = vld [vmem:[%s2131 + $0x58] sm:$0xff]
                  %2156 = vst [vmem:[%s2132 + $0x58] sm:$0xff] %v2155
                  %v2157 = vld [vmem:[%s2131 + $0x60] sm:$0xff]
                  %2158 = vst [vmem:[%s2132 + $0x60] sm:$0xff] %v2157
                  %v2159 = vld [vmem:[%s2131 + $0x68] sm:$0xff]
                  %2160 = vst [vmem:[%s2132 + $0x68] sm:$0xff] %v2159
                  %v2161 = vld [vmem:[%s2131 + $0x70] sm:$0xff]
                  %2162 = vst [vmem:[%s2132 + $0x70] sm:$0xff] %v2161
                  %v2163 = vld [vmem:[%s2131 + $0x78] sm:$0xff]
                  %2164 = vst [vmem:[%s2132 + $0x78] sm:$0xff] %v2163
                  %v2165 = vld [vmem:[%s2131 + $0x80] sm:$0xff]
                  %2166 = vst [vmem:[%s2132 + $0x400] sm:$0xff] %v2165
                  %v2167 = vld [vmem:[%s2131 + $0x88] sm:$0xff]
                  %2168 = vst [vmem:[%s2132 + $0x408] sm:$0xff] %v2167
                  %v2169 = vld [vmem:[%s2131 + $0x90] sm:$0xff]
                  %2170 = vst [vmem:[%s2132 + $0x410] sm:$0xff] %v2169
                  %v2171 = vld [vmem:[%s2131 + $0x98] sm:$0xff]
                  %2172 = vst [vmem:[%s2132 + $0x418] sm:$0xff] %v2171
                  %v2173 = vld [vmem:[%s2131 + $0xa0] sm:$0xff]
                  %2174 = vst [vmem:[%s2132 + $0x420] sm:$0xff] %v2173
                  %v2175 = vld [vmem:[%s2131 + $0xa8] sm:$0xff]
                  %2176 = vst [vmem:[%s2132 + $0x428] sm:$0xff] %v2175
                  %v2177 = vld [vmem:[%s2131 + $0xb0] sm:$0xff]
                  %2178 = vst [vmem:[%s2132 + $0x430] sm:$0xff] %v2177
                  %v2179 = vld [vmem:[%s2131 + $0xb8] sm:$0xff]
                  %2180 = vst [vmem:[%s2132 + $0x438] sm:$0xff] %v2179
                  %v2181 = vld [vmem:[%s2131 + $0xc0] sm:$0xff]
                  %2182 = vst [vmem:[%s2132 + $0x440] sm:$0xff] %v2181
                  %v2183 = vld [vmem:[%s2131 + $0xc8] sm:$0xff]
                  %2184 = vst [vmem:[%s2132 + $0x448] sm:$0xff] %v2183
                  %v2185 = vld [vmem:[%s2131 + $0xd0] sm:$0xff]
                  %2186 = vst [vmem:[%s2132 + $0x450] sm:$0xff] %v2185
                  %v2187 = vld [vmem:[%s2131 + $0xd8] sm:$0xff]
                  %2188 = vst [vmem:[%s2132 + $0x458] sm:$0xff] %v2187
                  %v2189 = vld [vmem:[%s2131 + $0xe0] sm:$0xff]
                  %2190 = vst [vmem:[%s2132 + $0x460] sm:$0xff] %v2189
                  %v2191 = vld [vmem:[%s2131 + $0xe8] sm:$0xff]
                  %2192 = vst [vmem:[%s2132 + $0x468] sm:$0xff] %v2191
                  %v2193 = vld [vmem:[%s2131 + $0xf0] sm:$0xff]
                  %2194 = vst [vmem:[%s2132 + $0x470] sm:$0xff] %v2193
                  %v2195 = vld [vmem:[%s2131 + $0xf8] sm:$0xff]
                  %2196 = vst [vmem:[%s2132 + $0x478] sm:$0xff] %v2195
                $region224: #{tpu_custom_call.1} parent=218 // loop_footer
                  %s2130 = sadd.s32 1, %s2126
                $region225: #{tpu_custom_call.1} parent=218 // loop_footer_branch
                  %2125 = sbr.rel target = $region221
                $region226: #{tpu_custom_call.1} parent=218 // loop_exit
                  _
              $region219: #{tpu_custom_call.1} parent=203 // pred_fallthru
                _
              // Predicated region
              $region227: #{tpu_custom_call.1} parent=203 // pred_check
                _
              $region228: #{tpu_custom_call.1} parent=203 // pred_check_branch
                %2198 = sbr.rel target = $region230
              $region229: #{tpu_custom_call.1} parent=203 // pred_region
                _
              $region230: #{tpu_custom_call.1} parent=203 // pred_fallthru
                _
            $region204: #{tpu_custom_call.1} parent=199 // pred_fallthru
              _
            // Predicated region
            $region205: #{tpu_custom_call.1} parent=199 // pred_check
              _
            $region206: #{tpu_custom_call.1} parent=199 // pred_check_branch
              %2049 = sbr.rel target = $region208
            $region207: #{tpu_custom_call.1} parent=199 // pred_region
              loop: start=0, step=1, limit=1
              $region209: #{tpu_custom_call.1} parent=207 // loop_pre_header
                _
              $region210: #{tpu_custom_call.1} parent=207 // loop_header
                %s2052 = sphi 0, %s2056
                %p2053 = scmp.ge.s32.totalorder %s2052, 1
                %s2057 = sphi %s2030, %s2030
                %s2058 = sphi %s2043, %s2043
              $region211: #{tpu_custom_call.1} parent=207 // loop_header_branch
                %2055 = sbr.rel (%p2053) target = $region215
              $region212: #{tpu_custom_call.1} parent=207 // loop_body
                %v2059 = vld [vmem:[%s2057] sm:$0xff]
                %2060 = vst [vmem:[%s2058] sm:$0xff] %v2059
                %v2061 = vld [vmem:[%s2057 + $0x8] sm:$0xff]
                %2062 = vst [vmem:[%s2058 + $0x8] sm:$0xff] %v2061
                %v2063 = vld [vmem:[%s2057 + $0x10] sm:$0xff]
                %2064 = vst [vmem:[%s2058 + $0x10] sm:$0xff] %v2063
                %v2065 = vld [vmem:[%s2057 + $0x18] sm:$0xff]
                %2066 = vst [vmem:[%s2058 + $0x18] sm:$0xff] %v2065
                %v2067 = vld [vmem:[%s2057 + $0x20] sm:$0xff]
                %2068 = vst [vmem:[%s2058 + $0x20] sm:$0xff] %v2067
                %v2069 = vld [vmem:[%s2057 + $0x28] sm:$0xff]
                %2070 = vst [vmem:[%s2058 + $0x28] sm:$0xff] %v2069
                %v2071 = vld [vmem:[%s2057 + $0x30] sm:$0xff]
                %2072 = vst [vmem:[%s2058 + $0x30] sm:$0xff] %v2071
                %v2073 = vld [vmem:[%s2057 + $0x38] sm:$0xff]
                %2074 = vst [vmem:[%s2058 + $0x38] sm:$0xff] %v2073
                %v2075 = vld [vmem:[%s2057 + $0x40] sm:$0xff]
                %2076 = vst [vmem:[%s2058 + $0x40] sm:$0xff] %v2075
                %v2077 = vld [vmem:[%s2057 + $0x48] sm:$0xff]
                %2078 = vst [vmem:[%s2058 + $0x48] sm:$0xff] %v2077
                %v2079 = vld [vmem:[%s2057 + $0x50] sm:$0xff]
                %2080 = vst [vmem:[%s2058 + $0x50] sm:$0xff] %v2079
                %v2081 = vld [vmem:[%s2057 + $0x58] sm:$0xff]
                %2082 = vst [vmem:[%s2058 + $0x58] sm:$0xff] %v2081
                %v2083 = vld [vmem:[%s2057 + $0x60] sm:$0xff]
                %2084 = vst [vmem:[%s2058 + $0x60] sm:$0xff] %v2083
                %v2085 = vld [vmem:[%s2057 + $0x68] sm:$0xff]
                %2086 = vst [vmem:[%s2058 + $0x68] sm:$0xff] %v2085
                %v2087 = vld [vmem:[%s2057 + $0x70] sm:$0xff]
                %2088 = vst [vmem:[%s2058 + $0x70] sm:$0xff] %v2087
                %v2089 = vld [vmem:[%s2057 + $0x78] sm:$0xff]
                %2090 = vst [vmem:[%s2058 + $0x78] sm:$0xff] %v2089
                %v2091 = vld [vmem:[%s2057 + $0x80] sm:$0xff]
                %2092 = vst [vmem:[%s2058 + $0x400] sm:$0xff] %v2091
                %v2093 = vld [vmem:[%s2057 + $0x88] sm:$0xff]
                %2094 = vst [vmem:[%s2058 + $0x408] sm:$0xff] %v2093
                %v2095 = vld [vmem:[%s2057 + $0x90] sm:$0xff]
                %2096 = vst [vmem:[%s2058 + $0x410] sm:$0xff] %v2095
                %v2097 = vld [vmem:[%s2057 + $0x98] sm:$0xff]
                %2098 = vst [vmem:[%s2058 + $0x418] sm:$0xff] %v2097
                %v2099 = vld [vmem:[%s2057 + $0xa0] sm:$0xff]
                %2100 = vst [vmem:[%s2058 + $0x420] sm:$0xff] %v2099
                %v2101 = vld [vmem:[%s2057 + $0xa8] sm:$0xff]
                %2102 = vst [vmem:[%s2058 + $0x428] sm:$0xff] %v2101
                %v2103 = vld [vmem:[%s2057 + $0xb0] sm:$0xff]
                %2104 = vst [vmem:[%s2058 + $0x430] sm:$0xff] %v2103
                %v2105 = vld [vmem:[%s2057 + $0xb8] sm:$0xff]
                %2106 = vst [vmem:[%s2058 + $0x438] sm:$0xff] %v2105
                %v2107 = vld [vmem:[%s2057 + $0xc0] sm:$0xff]
                %2108 = vst [vmem:[%s2058 + $0x440] sm:$0xff] %v2107
                %v2109 = vld [vmem:[%s2057 + $0xc8] sm:$0xff]
                %2110 = vst [vmem:[%s2058 + $0x448] sm:$0xff] %v2109
                %v2111 = vld [vmem:[%s2057 + $0xd0] sm:$0xff]
                %2112 = vst [vmem:[%s2058 + $0x450] sm:$0xff] %v2111
                %v2113 = vld [vmem:[%s2057 + $0xd8] sm:$0xff]
                %2114 = vst [vmem:[%s2058 + $0x458] sm:$0xff] %v2113
                %v2115 = vld [vmem:[%s2057 + $0xe0] sm:$0xff]
                %2116 = vst [vmem:[%s2058 + $0x460] sm:$0xff] %v2115
                %v2117 = vld [vmem:[%s2057 + $0xe8] sm:$0xff]
                %2118 = vst [vmem:[%s2058 + $0x468] sm:$0xff] %v2117
                %v2119 = vld [vmem:[%s2057 + $0xf0] sm:$0xff]
                %2120 = vst [vmem:[%s2058 + $0x470] sm:$0xff] %v2119
                %v2121 = vld [vmem:[%s2057 + $0xf8] sm:$0xff]
                %2122 = vst [vmem:[%s2058 + $0x478] sm:$0xff] %v2121
              $region213: #{tpu_custom_call.1} parent=207 // loop_footer
                %s2056 = sadd.s32 1, %s2052
              $region214: #{tpu_custom_call.1} parent=207 // loop_footer_branch
                %2051 = sbr.rel target = $region210
              $region215: #{tpu_custom_call.1} parent=207 // loop_exit
                _
            $region208: #{tpu_custom_call.1} parent=199 // pred_fallthru
              _
          $region200: #{tpu_custom_call.1} parent=195 // pred_fallthru
            _
          %2199 = vnop
        $region196: #{tpu_custom_call.1} parent=171 // pred_fallthru
          _
        // Predicated region
        $region231: #{tpu_custom_call.1} parent=171 // pred_check
          %p2200 = pneg %p203
        $region232: #{tpu_custom_call.1} parent=171 // pred_check_branch
          %2202 = sbr.rel (%p2200) target = $region234
        $region233: #{tpu_custom_call.1} parent=171 // pred_region
          #allocation10 [shape = 'u32[6]{0}', space=smem, size = 0x18, scoped, tag = 'DMA stride descriptor']
          %s2203 = smul.u32 16, %s26
          %s2205 = ssub.s32 4096, 4096
          %2206 = vsyncadd %s2032, %s2205
          %s2207 = smul.addr %s2203, 2
          %s2208 = sadd.s32 %s27, %s2207
          %s2209 = smul.addr %s25, 64
          %s2210 = sadd.s32 %s2208, %s2209
          %s2211 = smul.addr %s2210, 128
          %s2212 = scalar_lea.hbm %s5, %s2211
          %s2214 = sshll.u32 1, 14
          %s2215 = sxor.u32 4294967295, %s2214
          %s2218 = sshll.u32 7, 18
          %s2219 = sxor.u32 4294967295, %s2218
          %s2220 = sand.u32 0, %s2219
          %s2222 = sor.u32 %s2220, 0
          %s2224 = sshll.u32 3, 24
          %s2225 = sxor.u32 4294967295, %s2224
          %s2226 = sand.u32 %s2222, %s2225
          %s2228 = sor.u32 %s2226, 0
          %s2229 = sshll.u32 %s2035, 4
          %s2230 = int_to_ptr.vmem [resolvable:$true] %s2229
          %2236 = sst [smem:[#allocation10]] 2048
          %s2237 = scalar_lea.smem [#allocation10], 1
          %2238 = sst [smem:[%s2237]] 32768
          %s2239 = scalar_lea.smem [#allocation10], 2
          %2240 = sst [smem:[%s2239]] 16
          %s2241 = scalar_lea.smem [#allocation10], 3
          %2242 = sst [smem:[%s2241]] 128
          %s2243 = scalar_lea.smem [#allocation10], 4
          %2244 = sst [smem:[%s2243]] 256
          %s2245 = scalar_lea.smem [#allocation10], 5
          %2246 = sst [smem:[%s2245]] 8
          %2248 = dma.general %s2230, 4096, %s2212, %s2032, [#allocation9], [#allocation10], %s2228, 0
        $region234: #{tpu_custom_call.1} parent=171 // pred_fallthru
          _
      $region172: #{tpu_custom_call.1} parent=5 // pred_fallthru
        _
      %p2249 = scmp.le.s32.totalorder 2, %s15
      // Predicated region
      $region235: #{tpu_custom_call.1} parent=5 // pred_check
        %p2250 = pneg %p2249
      $region236: #{tpu_custom_call.1} parent=5 // pred_check_branch
        %2252 = sbr.rel (%p2250) target = $region238
      $region237: #{tpu_custom_call.1} parent=5 // pred_region
        %s2253 = ssub.s32 %s15, 2
        // Predicated region
        $region239: #{tpu_custom_call.1} parent=237 // pred_check
          %p2254 = pneg %p179
        $region240: #{tpu_custom_call.1} parent=237 // pred_check_branch
          %2256 = sbr.rel (%p2254) target = $region242
        $region241: #{tpu_custom_call.1} parent=237 // pred_region
          %s2257 = sand.u32 %s164, 1
          %s2258 = sand.u32 %s164, 1
          %s2259 = smul.addr %s2258, 256
          %s2260 = scalar_lea.vmem [#allocation6], %s2259
        $region242: #{tpu_custom_call.1} parent=237 // pred_fallthru
          _
        // Predicated region
        $region243: #{tpu_custom_call.1} parent=237 // pred_check
          %p2261 = pneg %p209
        $region244: #{tpu_custom_call.1} parent=237 // pred_check_branch
          %2263 = sbr.rel (%p2261) target = $region246
        $region245: #{tpu_custom_call.1} parent=237 // pred_region
          %s2264 = sand.u32 %s194, 1
          %s2265 = scalar_lea.sflag [#allocation8], %s2264
          %s2266 = sand.u32 %s194, 1
          %s2267 = smul.addr %s2266, 256
          %s2268 = scalar_lea.vmem [#allocation7], %s2267
          %2269 = dma.done %s2265, 4096
        $region246: #{tpu_custom_call.1} parent=237 // pred_fallthru
          _
      $region238: #{tpu_custom_call.1} parent=5 // pred_fallthru
        _
    $region6: #{tpu_custom_call.1} parent=1 // loop_footer
      %s19 = sadd.s32 1, %s15
    $region7: #{tpu_custom_call.1} parent=1 // loop_footer_branch
      %14 = sbr.rel target = $region3
    $region8: #{tpu_custom_call.1} parent=1 // loop_exit
      _
    %2270 = vsyncpa [#allocation8], 1
    %s2271 = scalar_lea.sflag [#allocation8], 1
    %2272 = vsyncpa %s2271, 1

</llo_original>
